<compile_context>
chip_gen: v7x
topology: tpu7x:2x2x1
jax: 0.10.0
libtpu: 0.0.40
codegen_flags: <defaults>
</compile_context>

<pallas_src>
import functools

import jax
import jax.numpy as jnp
from jax.experimental import pallas as pl
from jax.experimental.pallas import tpu as pltpu

_LANE = 128


def _opnet_kernel(x_ref, w1_ref, b1_ref, w2_ref, b2_ref, w3_ref, b3_ref, o_ref):
    """One (batch, N-tile) block per grid step, channels-first.

    x_ref : (1, 256, TN)  bf16   VMEM
    w1_ref: (128, 256)    bf16   b1_ref: (128, 1) f32   (BN folded)
    w2_ref: (128, 128)    bf16   b2_ref: (128, 1) f32   (BN folded)
    w3_ref: (C3, 128)     bf16   b3_ref: (C3, 1)  f32
    o_ref : (1, C3, TN)   f32    (lane-dense: TN is a multiple of 128)
    """
    x = x_ref[0]  # (256, TN) bf16

    h = jnp.dot(w1_ref[...], x, preferred_element_type=jnp.float32)
    h = jnp.maximum(h + b1_ref[...], 0.0)          # bias + ReLU in f32 (VPU)
    h = h.astype(jnp.bfloat16)                     # back to bf16 for the MXU

    h = jnp.dot(w2_ref[...], h, preferred_element_type=jnp.float32)
    h = jnp.maximum(h + b2_ref[...], 0.0)
    h = h.astype(jnp.bfloat16)

    y = jnp.dot(w3_ref[...], h, preferred_element_type=jnp.float32) + b3_ref[...]
    o_ref[0] = y.astype(o_ref.dtype)


def _pick_tile_n(n_pad):
    # n_pad is always a multiple of 128, so this always terminates.
    for t in (512, 256, 128):
        if n_pad % t == 0:
            return t
    return n_pad


@functools.partial(jax.jit, static_argnames=("num_angle",))
def operation_net_forward(vp_features, params, num_angle):
    """vp_features: (B, 256, S, D) float32.  Returns dict of 3 heads,
    each (B, num_angle, S, D) float32."""
    B, C_in, S, D = vp_features.shape
    N = S * D
    C3 = 3 * num_angle
    eps = 1e-5

    # ---- fold BatchNorm (inference mode) into conv1 / conv2, in f32 ----
    def fold(w, b, gamma, beta, mean, var):
        scale = gamma / jnp.sqrt(var + eps)        # keep fold in f32
        w_eff = w * scale[:, None]
        b_eff = (b - mean) * scale + beta
        return w_eff, b_eff

    w1, b1 = fold(params["w1"], params["b1"], params["bn1_gamma"],
                  params["bn1_beta"], params["bn1_mean"], params["bn1_var"])
    w2, b2 = fold(params["w2"], params["b2"], params["bn2_gamma"],
                  params["bn2_beta"], params["bn2_mean"], params["bn2_var"])
    w3, b3 = params["w3"], params["b3"]

    # bf16 weights for the MXU; f32 biases shaped (C, 1) for channels-first add
    w1b = w1.astype(jnp.bfloat16)
    w2b = w2.astype(jnp.bfloat16)
    w3b = w3.astype(jnp.bfloat16)
    b1c = b1.astype(jnp.float32)[:, None]
    b2c = b2.astype(jnp.float32)[:, None]
    b3c = b3.astype(jnp.float32)[:, None]

    # channels-first: (B, 256, S, D) -> (B, 256, N). Free reshape, no transpose.
    x = vp_features.reshape(B, C_in, N).astype(jnp.bfloat16)

    # Pad N to a multiple of 128 only if needed (real GraspNet N=4096 needs no pad).
    n_pad = ((N + _LANE - 1) // _LANE) * _LANE
    if n_pad != N:
        x = jnp.pad(x, ((0, 0), (0, 0), (0, n_pad - N)))
    tile_n = _pick_tile_n(n_pad)
    grid = (B, n_pad // tile_n)

    flops = 2 * B * n_pad * (C_in * 128 + 128 * 128 + 128 * C3)
    bytes_accessed = (B * C_in * n_pad * 2            # x (bf16)
                      + B * C3 * n_pad * 4            # out (f32)
                      + (w1b.size + w2b.size + w3b.size) * 2
                      + (b1c.size + b2c.size + b3c.size) * 4)

    out = pl.pallas_call(
        _opnet_kernel,
        out_shape=jax.ShapeDtypeStruct((B, C3, n_pad), jnp.float32),
        grid_spec=pltpu.PrefetchScalarGridSpec(
            num_scalar_prefetch=0,
            grid=grid,
            in_specs=[
                pl.BlockSpec((1, C_in, tile_n), lambda b, n: (b, 0, n)),
                pl.BlockSpec((128, C_in), lambda b, n: (0, 0)),
                pl.BlockSpec((128, 1), lambda b, n: (0, 0)),
                pl.BlockSpec((128, 128), lambda b, n: (0, 0)),
                pl.BlockSpec((128, 1), lambda b, n: (0, 0)),
                pl.BlockSpec((C3, 128), lambda b, n: (0, 0)),
                pl.BlockSpec((C3, 1), lambda b, n: (0, 0)),
            ],
            out_specs=pl.BlockSpec((1, C3, tile_n), lambda b, n: (b, 0, n)),
        ),
        compiler_params=pltpu.CompilerParams(
            dimension_semantics=("parallel", "parallel")),
        cost_estimate=pl.CostEstimate(
            flops=flops, transcendentals=0, bytes_accessed=bytes_accessed),
    )(x, w1b, b1c, w2b, b2c, w3b, b3c)

    # (B, C3, n_pad) -> (B, C3, S, D). Slice off padding; reshape is free.
    out = out[:, :, :N].reshape(B, C3, S, D)

    return {
        "grasp_score_pred": out[:, 0:num_angle],
        "grasp_angle_cls_pred": out[:, num_angle:2 * num_angle],
        "grasp_width_pred": out[:, 2 * num_angle:3 * num_angle],
    }


def init_params(key, num_angle):
    """Deterministic parameter init matching the module's shapes."""
    k1, k2, k3, k4, k5, k6 = jax.random.split(key, 6)
    c3 = 3 * num_angle
    return {
        # Conv1d(256,128,1): weight (128,256), bias (128,)
        "w1": jax.random.normal(k1, (128, 256), jnp.float32) * 0.05,
        "b1": jax.random.normal(k2, (128,), jnp.float32) * 0.01,
        # Conv1d(128,128,1)
        "w2": jax.random.normal(k3, (128, 128), jnp.float32) * 0.05,
        "b2": jax.random.normal(k4, (128,), jnp.float32) * 0.01,
        # Conv1d(128, 3*num_angle, 1)
        "w3": jax.random.normal(k5, (c3, 128), jnp.float32) * 0.05,
        "b3": jax.random.normal(k6, (c3,), jnp.float32) * 0.01,
        # BatchNorm1d(128) defaults: gamma=1, beta=0, mean=0, var=1
        "bn1_gamma": jnp.ones((128,), jnp.float32),
        "bn1_beta": jnp.zeros((128,), jnp.float32),
        "bn1_mean": jnp.zeros((128,), jnp.float32),
        "bn1_var": jnp.ones((128,), jnp.float32),
        "bn2_gamma": jnp.ones((128,), jnp.float32),
        "bn2_beta": jnp.zeros((128,), jnp.float32),
        "bn2_mean": jnp.zeros((128,), jnp.float32),
        "bn2_var": jnp.ones((128,), jnp.float32),
    }


def _reference(vp_features, params, num_angle):
    """Pure-JAX f32 reference of the PyTorch eval-mode forward."""
    B, C, S, D = vp_features.shape
    N = S * D
    eps = 1e-5
    x = vp_features.reshape(B, C, N)

    def bn(h, g, beta, m, v):
        return ((h - m[None, :, None]) / jnp.sqrt(v[None, :, None] + eps)
                * g[None, :, None] + beta[None, :, None])

    h = jnp.einsum("oc,bcn->bon", params["w1"], x) + params["b1"][None, :, None]
    h = jax.nn.relu(bn(h, params["bn1_gamma"], params["bn1_beta"],
                       params["bn1_mean"], params["bn1_var"]))
    h = jnp.einsum("oc,bcn->bon", params["w2"], h) + params["b2"][None, :, None]
    h = jax.nn.relu(bn(h, params["bn2_gamma"], params["bn2_beta"],
                       params["bn2_mean"], params["bn2_var"]))
    y = jnp.einsum("oc,bcn->bon", params["w3"], h) + params["b3"][None, :, None]
    return y.reshape(B, 3 * num_angle, S, D)


if __name__ == "__main__":
    key = jax.random.PRNGKey(0)
    k_in, k_par = jax.random.split(key)

    # batch=2, channels=256 (fixed by module), num_seed=256, num_depth=4 -> N=1024
    B, C, S, D = 2, 256, 256, 4
    num_angle = 12

    vp_features = jax.random.normal(k_in, (B, C, S, D), jnp.float32)
    params = init_params(k_par, num_angle)

    end_points = operation_net_forward(vp_features, params, num_angle)
    jax.block_until_ready(end_points)

    # shape checks
    assert end_points["grasp_score_pred"].shape == (B, num_angle, S, D)
    assert end_points["grasp_angle_cls_pred"].shape == (B, num_angle, S, D)
    assert end_points["grasp_width_pred"].shape == (B, num_angle, S, D)

    # loose numerical check vs f32 reference (kernel uses bf16 inputs, f32 accum)
    ref = _reference(vp_features, params, num_angle)
    pred = jnp.concatenate([end_points["grasp_score_pred"],
                            end_points["grasp_angle_cls_pred"],
                            end_points["grasp_width_pred"]], axis=1)
    max_err = float(jnp.max(jnp.abs(pred - ref)))
    assert max_err < 5e-2, f"max abs error too large: {max_err}"

    print("KERNEL_OK")
</pallas_src>

<mosaic_0001>
module attributes {stable_mosaic.version = 11 : i64} {
  func.func @_opnet_kernel(%arg0: i32, %arg1: i32, %arg2: memref<1x256x512xbf16, #tpu.memory_space<vmem>>, %arg3: memref<128x256xbf16, #tpu.memory_space<vmem>>, %arg4: memref<128x1xf32, #tpu.memory_space<vmem>>, %arg5: memref<128x128xbf16, #tpu.memory_space<vmem>>, %arg6: memref<128x1xf32, #tpu.memory_space<vmem>>, %arg7: memref<36x128xbf16, #tpu.memory_space<vmem>>, %arg8: memref<36x1xf32, #tpu.memory_space<vmem>>, %arg9: memref<1x36x512xf32, #tpu.memory_space<vmem>>) attributes {dimension_semantics = [#tpu.dimension_semantics<parallel>, #tpu.dimension_semantics<parallel>], iteration_bounds = array<i64: 2, 2>, scalar_prefetch = 0 : i64, scratch_operands = 0 : i64, tpu.core_type = #tpu.core_type<tc>, window_params = [{transform_indices = @transform_0, window_bounds = array<i64: 1, 256, 512>}, {pipeline_mode = #tpu.pipeline_mode<synchronous>, transform_indices = @transform_1, window_bounds = array<i64: 128, 256>}, {pipeline_mode = #tpu.pipeline_mode<synchronous>, transform_indices = @transform_2, window_bounds = array<i64: 128, 1>}, {pipeline_mode = #tpu.pipeline_mode<synchronous>, transform_indices = @transform_3, window_bounds = array<i64: 128, 128>}, {pipeline_mode = #tpu.pipeline_mode<synchronous>, transform_indices = @transform_4, window_bounds = array<i64: 128, 1>}, {pipeline_mode = #tpu.pipeline_mode<synchronous>, transform_indices = @transform_5, window_bounds = array<i64: 36, 128>}, {pipeline_mode = #tpu.pipeline_mode<synchronous>, transform_indices = @transform_6, window_bounds = array<i64: 36, 1>}, {transform_indices = @transform_7, window_bounds = array<i64: 1, 36, 512>}]} {
    %c0 = arith.constant 0 : index
    %c0_0 = arith.constant 0 : index
    %c0_1 = arith.constant 0 : index
    %0 = vector.load %arg2[%c0, %c0_0, %c0_1] : memref<1x256x512xbf16, #tpu.memory_space<vmem>>, vector<1x256x512xbf16>
    %1 = vector.shape_cast %0 : vector<1x256x512xbf16> to vector<256x512xbf16>
    %c0_2 = arith.constant 0 : index
    %c0_3 = arith.constant 0 : index
    %2 = vector.load %arg3[%c0_2, %c0_3] : memref<128x256xbf16, #tpu.memory_space<vmem>>, vector<128x256xbf16>
    %cst = arith.constant dense<0.000000e+00> : vector<128x512xf32>
    %3 = tpu.matmul %2, %1, %cst {dimension_numbers = #tpu.dot_dimension_numbers<[1], [0], [0], [1], [0, 0, 1, 1], [], []>} : vector<128x256xbf16>, vector<256x512xbf16>, vector<128x512xf32> -> vector<128x512xf32>
    %c0_4 = arith.constant 0 : index
    %c0_5 = arith.constant 0 : index
    %4 = vector.load %arg4[%c0_4, %c0_5] : memref<128x1xf32, #tpu.memory_space<vmem>>, vector<128x1xf32>
    %5 = vector.broadcast %4 : vector<128x1xf32> to vector<128x512xf32>
    %6 = arith.addf %3, %5 : vector<128x512xf32>
    %cst_6 = arith.constant 0.000000e+00 : f32
    %7 = vector.broadcast %cst_6 : f32 to vector<128x512xf32>
    %8 = arith.maximumf %6, %7 : vector<128x512xf32>
    %9 = arith.truncf %8 : vector<128x512xf32> to vector<128x512xbf16>
    %c0_7 = arith.constant 0 : index
    %c0_8 = arith.constant 0 : index
    %10 = vector.load %arg5[%c0_7, %c0_8] : memref<128x128xbf16, #tpu.memory_space<vmem>>, vector<128x128xbf16>
    %cst_9 = arith.constant dense<0.000000e+00> : vector<128x512xf32>
    %11 = tpu.matmul %10, %9, %cst_9 {dimension_numbers = #tpu.dot_dimension_numbers<[1], [0], [0], [1], [0, 0, 1, 1], [], []>} : vector<128x128xbf16>, vector<128x512xbf16>, vector<128x512xf32> -> vector<128x512xf32>
    %c0_10 = arith.constant 0 : index
    %c0_11 = arith.constant 0 : index
    %12 = vector.load %arg6[%c0_10, %c0_11] : memref<128x1xf32, #tpu.memory_space<vmem>>, vector<128x1xf32>
    %13 = vector.broadcast %12 : vector<128x1xf32> to vector<128x512xf32>
    %14 = arith.addf %11, %13 : vector<128x512xf32>
    %cst_12 = arith.constant 0.000000e+00 : f32
    %15 = vector.broadcast %cst_12 : f32 to vector<128x512xf32>
    %16 = arith.maximumf %14, %15 : vector<128x512xf32>
    %17 = arith.truncf %16 : vector<128x512xf32> to vector<128x512xbf16>
    %c0_13 = arith.constant 0 : index
    %c0_14 = arith.constant 0 : index
    %18 = vector.load %arg7[%c0_13, %c0_14] : memref<36x128xbf16, #tpu.memory_space<vmem>>, vector<36x128xbf16>
    %cst_15 = arith.constant dense<0.000000e+00> : vector<36x512xf32>
    %19 = tpu.matmul %18, %17, %cst_15 {dimension_numbers = #tpu.dot_dimension_numbers<[1], [0], [0], [1], [0, 0, 1, 1], [], []>} : vector<36x128xbf16>, vector<128x512xbf16>, vector<36x512xf32> -> vector<36x512xf32>
    %c0_16 = arith.constant 0 : index
    %c0_17 = arith.constant 0 : index
    %20 = vector.load %arg8[%c0_16, %c0_17] : memref<36x1xf32, #tpu.memory_space<vmem>>, vector<36x1xf32>
    %21 = vector.broadcast %20 : vector<36x1xf32> to vector<36x512xf32>
    %22 = arith.addf %19, %21 : vector<36x512xf32>
    %c0_18 = arith.constant 0 : index
    %c0_19 = arith.constant 0 : index
    %c0_20 = arith.constant 0 : index
    %23 = vector.load %arg9[%c0_18, %c0_19, %c0_20] : memref<1x36x512xf32, #tpu.memory_space<vmem>>, vector<1x36x512xf32>
    %24 = vector.shape_cast %23 : vector<1x36x512xf32> to vector<36x512xf32>
    %25 = vector.shape_cast %22 : vector<36x512xf32> to vector<1x36x512xf32>
    tpu.vector_store %arg9[%c0_18, %c0_19, %c0_20], %25 {strides = array<i32>} : memref<1x36x512xf32, #tpu.memory_space<vmem>>, vector<1x36x512xf32>,
    return
  }
  func.func @transform_0(%arg0: i32, %arg1: i32) -> (i32, i32, i32) {
    %c0_i32 = arith.constant 0 : i32
    %c0_i32_0 = arith.constant 0 : i32
    return %arg0, %c0_i32, %arg1 : i32, i32, i32
  }
  func.func @transform_1(%arg0: i32, %arg1: i32) -> (i32, i32) {
    %c0_i32 = arith.constant 0 : i32
    %c0_i32_0 = arith.constant 0 : i32
    %c0_i32_1 = arith.constant 0 : i32
    return %c0_i32, %c0_i32_0 : i32, i32
  }
  func.func @transform_2(%arg0: i32, %arg1: i32) -> (i32, i32) {
    %c0_i32 = arith.constant 0 : i32
    %c0_i32_0 = arith.constant 0 : i32
    %c0_i32_1 = arith.constant 0 : i32
    return %c0_i32, %c0_i32_0 : i32, i32
  }
  func.func @transform_3(%arg0: i32, %arg1: i32) -> (i32, i32) {
    %c0_i32 = arith.constant 0 : i32
    %c0_i32_0 = arith.constant 0 : i32
    %c0_i32_1 = arith.constant 0 : i32
    return %c0_i32, %c0_i32_0 : i32, i32
  }
  func.func @transform_4(%arg0: i32, %arg1: i32) -> (i32, i32) {
    %c0_i32 = arith.constant 0 : i32
    %c0_i32_0 = arith.constant 0 : i32
    %c0_i32_1 = arith.constant 0 : i32
    return %c0_i32, %c0_i32_0 : i32, i32
  }
  func.func @transform_5(%arg0: i32, %arg1: i32) -> (i32, i32) {
    %c0_i32 = arith.constant 0 : i32
    %c0_i32_0 = arith.constant 0 : i32
    %c0_i32_1 = arith.constant 0 : i32
    return %c0_i32, %c0_i32_0 : i32, i32
  }
  func.func @transform_6(%arg0: i32, %arg1: i32) -> (i32, i32) {
    %c0_i32 = arith.constant 0 : i32
    %c0_i32_0 = arith.constant 0 : i32
    %c0_i32_1 = arith.constant 0 : i32
    return %c0_i32, %c0_i32_0 : i32, i32
  }
  func.func @transform_7(%arg0: i32, %arg1: i32) -> (i32, i32, i32) {
    %c0_i32 = arith.constant 0 : i32
    %c0_i32_0 = arith.constant 0 : i32
    return %arg0, %c0_i32, %arg1 : i32, i32, i32
  }
}

</mosaic_0001>

<llo_original>
// kernel: operation_net_forward.1
$region0: #{operation_net_forward.1}
  #allocation0 [shape = 'u32[]', space=smem, size = 0x4, offset = 0x4, fixed_abs, tag = 'smem constant byte address 0x4 - core index']
  #allocation1 [shape = 'u32[144,128]{1,0:T(1,128)}', space=vmem, size = 0x12000, scoped, tag = 'internal scratch']
  %s0 = inlined_call_operand.vmem [shape: bf16[2,256,1024], index: 0, kind: input, shape index: {}]
  %s1 = inlined_call_operand.vmem [shape: bf16[128,256], index: 1, kind: input, shape index: {}]
  %s2 = inlined_call_operand.vmem [shape: f32[128,1], index: 2, kind: input, shape index: {}]
  %s3 = inlined_call_operand.vmem [shape: bf16[128,128], index: 3, kind: input, shape index: {}]
  %s4 = inlined_call_operand.vmem [shape: f32[128,1], index: 4, kind: input, shape index: {}]
  %s5 = inlined_call_operand.vmem [shape: bf16[36,128], index: 5, kind: input, shape index: {}]
  %s6 = inlined_call_operand.vmem [shape: f32[36,1], index: 6, kind: input, shape index: {}]
  %s7 = inlined_call_operand.vmem [shape: f32[2,36,1024], index: 7, kind: output, shape index: {}]
  %s8 = sld [smem:[#allocation0]]
  $region103: #{operation_net_forward.1} parent=0
    _
  %s10 = ssub.s32 1, %s8
  %s11 = scalar_select 0, %s10, %s8
  $region1: #{operation_net_forward.1} parent=0
    #allocation2 [shape = 'u8[524288]{0}', space=vmem, size = 0x80000, scoped, tag = 'input window, operand 0']
    #allocation3 [shape = 'u8[163840]{0}', space=vmem, size = 0x28000, scoped, tag = 'output window, operand 0']
    loop: start=0, step=1, limit=6
    $region2: #{operation_net_forward.1} parent=1 // loop_pre_header
      _
    $region3: #{operation_net_forward.1} parent=1 // loop_header
      %s13 = sphi 0, %s17
      %p14 = scmp.ge.s32.totalorder %s13, 6
      %s20 = sphi 0, %s32
      %s21 = sphi 0, %s28
      %s22 = sphi 0, %s20
      %s23 = sphi 0, %s21
      %s24 = sphi 0, %s22
      %s25 = sphi 0, %s23
      %s37 = sphi 0, %s39
      %s40 = sphi 0, %s37
      %s41 = sphi 0, %s40
      %s57 = sphi 0, %s41
      %s61 = sphi 0, %s61
      %s63 = sphi 0, %s61
      %s64 = sphi 0, %s63
      %s78 = sphi 0, %s64
      %s82 = sphi 0, %s82
      %s84 = sphi 0, %s82
      %s85 = sphi 0, %s84
      %s99 = sphi 0, %s85
      %s103 = sphi 0, %s103
      %s105 = sphi 0, %s103
      %s106 = sphi 0, %s105
      %s120 = sphi 0, %s106
      %s124 = sphi 0, %s124
      %s126 = sphi 0, %s124
      %s127 = sphi 0, %s126
      %s141 = sphi 0, %s127
      %s145 = sphi 0, %s145
      %s147 = sphi 0, %s145
      %s148 = sphi 0, %s147
      %s162 = sphi 0, %s148
      %s166 = sphi 0, %s166
      %s168 = sphi 0, %s166
      %s169 = sphi 0, %s168
      %s183 = sphi 0, %s169
      %s191 = sphi 0, %s193
      %s194 = sphi 0, %s191
      %s195 = sphi 0, %s194
      %s211 = sphi 0, %s195
    $region4: #{operation_net_forward.1} parent=1 // loop_header_branch
      %16 = sbr.rel (%p14) target = $region8
    $region5: #{operation_net_forward.1} parent=1 // loop_body
      %s18 = ssub.s32 %s13, 1
      %s19 = ssub.s32 %s13, 2
      %s26 = sadd.s32 1, %s21
      %p27 = scmp.ge.s32.totalorder %s26, 2
      %s28 = scalar_select %p27, 0, %s26
      %s29 = sadd.s32 1, %s20
      %s30 = scalar_select %p27, %s29, %s20
      %p31 = scmp.ge.s32.totalorder %s30, 2
      %s32 = scalar_select %p31, 0, %s30
      %s33 = ssub.s32 %s20, %s32
      %s34 = ssub.s32 %s21, %s28
      %s35 = sor.u32 %s33, %s34
      %p36 = scmp.eq.s32.totalorder %s35, 0
      %s38 = sadd.s32 %s37, 1
      %s39 = scalar_select %p36, %s37, %s38
      %p42 = pneg %p36
      %p43 = scmp.eq.s32.totalorder %s13, 3
      %p44 = por %p42, %p43
      %p45 = scmp.ne.s32.totalorder %s37, %s40
      %p46 = scmp.eq.s32.totalorder %s13, 0
      %p47 = por %p45, %p46
      %p48 = scmp.ne.s32.totalorder %s37, %s40
      %p49 = scmp.eq.s32.totalorder %s18, 3
      %p50 = por %p48, %p49
      %p51 = scmp.ne.s32.totalorder %s40, %s41
      %p52 = scmp.eq.s32.totalorder %s18, 0
      %p53 = por %p51, %p52
      %p54 = scmp.ne.s32.totalorder %s40, %s41
      %p55 = scmp.eq.s32.totalorder %s19, 3
      %p56 = por %p54, %p55
      %p58 = scmp.ne.s32.totalorder %s41, %s57
      %p59 = scmp.eq.s32.totalorder %s19, 0
      %p60 = por %p58, %p59
      %s62 = sadd.s32 %s61, 1
      %p65 = scmp.eq.s32.totalorder %s13, 3
      %p66 = scmp.ne.s32.totalorder %s61, %s63
      %p67 = scmp.eq.s32.totalorder %s13, 0
      %p68 = por %p66, %p67
      %p69 = scmp.ne.s32.totalorder %s61, %s63
      %p70 = scmp.eq.s32.totalorder %s18, 3
      %p71 = por %p69, %p70
      %p72 = scmp.ne.s32.totalorder %s63, %s64
      %p73 = scmp.eq.s32.totalorder %s18, 0
      %p74 = por %p72, %p73
      %p75 = scmp.ne.s32.totalorder %s63, %s64
      %p76 = scmp.eq.s32.totalorder %s19, 3
      %p77 = por %p75, %p76
      %p79 = scmp.ne.s32.totalorder %s64, %s78
      %p80 = scmp.eq.s32.totalorder %s19, 0
      %p81 = por %p79, %p80
      %s83 = sadd.s32 %s82, 1
      %p86 = scmp.eq.s32.totalorder %s13, 3
      %p87 = scmp.ne.s32.totalorder %s82, %s84
      %p88 = scmp.eq.s32.totalorder %s13, 0
      %p89 = por %p87, %p88
      %p90 = scmp.ne.s32.totalorder %s82, %s84
      %p91 = scmp.eq.s32.totalorder %s18, 3
      %p92 = por %p90, %p91
      %p93 = scmp.ne.s32.totalorder %s84, %s85
      %p94 = scmp.eq.s32.totalorder %s18, 0
      %p95 = por %p93, %p94
      %p96 = scmp.ne.s32.totalorder %s84, %s85
      %p97 = scmp.eq.s32.totalorder %s19, 3
      %p98 = por %p96, %p97
      %p100 = scmp.ne.s32.totalorder %s85, %s99
      %p101 = scmp.eq.s32.totalorder %s19, 0
      %p102 = por %p100, %p101
      %s104 = sadd.s32 %s103, 1
      %p107 = scmp.eq.s32.totalorder %s13, 3
      %p108 = scmp.ne.s32.totalorder %s103, %s105
      %p109 = scmp.eq.s32.totalorder %s13, 0
      %p110 = por %p108, %p109
      %p111 = scmp.ne.s32.totalorder %s103, %s105
      %p112 = scmp.eq.s32.totalorder %s18, 3
      %p113 = por %p111, %p112
      %p114 = scmp.ne.s32.totalorder %s105, %s106
      %p115 = scmp.eq.s32.totalorder %s18, 0
      %p116 = por %p114, %p115
      %p117 = scmp.ne.s32.totalorder %s105, %s106
      %p118 = scmp.eq.s32.totalorder %s19, 3
      %p119 = por %p117, %p118
      %p121 = scmp.ne.s32.totalorder %s106, %s120
      %p122 = scmp.eq.s32.totalorder %s19, 0
      %p123 = por %p121, %p122
      %s125 = sadd.s32 %s124, 1
      %p128 = scmp.eq.s32.totalorder %s13, 3
      %p129 = scmp.ne.s32.totalorder %s124, %s126
      %p130 = scmp.eq.s32.totalorder %s13, 0
      %p131 = por %p129, %p130
      %p132 = scmp.ne.s32.totalorder %s124, %s126
      %p133 = scmp.eq.s32.totalorder %s18, 3
      %p134 = por %p132, %p133
      %p135 = scmp.ne.s32.totalorder %s126, %s127
      %p136 = scmp.eq.s32.totalorder %s18, 0
      %p137 = por %p135, %p136
      %p138 = scmp.ne.s32.totalorder %s126, %s127
      %p139 = scmp.eq.s32.totalorder %s19, 3
      %p140 = por %p138, %p139
      %p142 = scmp.ne.s32.totalorder %s127, %s141
      %p143 = scmp.eq.s32.totalorder %s19, 0
      %p144 = por %p142, %p143
      %s146 = sadd.s32 %s145, 1
      %p149 = scmp.eq.s32.totalorder %s13, 3
      %p150 = scmp.ne.s32.totalorder %s145, %s147
      %p151 = scmp.eq.s32.totalorder %s13, 0
      %p152 = por %p150, %p151
      %p153 = scmp.ne.s32.totalorder %s145, %s147
      %p154 = scmp.eq.s32.totalorder %s18, 3
      %p155 = por %p153, %p154
      %p156 = scmp.ne.s32.totalorder %s147, %s148
      %p157 = scmp.eq.s32.totalorder %s18, 0
      %p158 = por %p156, %p157
      %p159 = scmp.ne.s32.totalorder %s147, %s148
      %p160 = scmp.eq.s32.totalorder %s19, 3
      %p161 = por %p159, %p160
      %p163 = scmp.ne.s32.totalorder %s148, %s162
      %p164 = scmp.eq.s32.totalorder %s19, 0
      %p165 = por %p163, %p164
      %s167 = sadd.s32 %s166, 1
      %p170 = scmp.eq.s32.totalorder %s13, 3
      %p171 = scmp.ne.s32.totalorder %s166, %s168
      %p172 = scmp.eq.s32.totalorder %s13, 0
      %p173 = por %p171, %p172
      %p174 = scmp.ne.s32.totalorder %s166, %s168
      %p175 = scmp.eq.s32.totalorder %s18, 3
      %p176 = por %p174, %p175
      %p177 = scmp.ne.s32.totalorder %s168, %s169
      %p178 = scmp.eq.s32.totalorder %s18, 0
      %p179 = por %p177, %p178
      %p180 = scmp.ne.s32.totalorder %s168, %s169
      %p181 = scmp.eq.s32.totalorder %s19, 3
      %p182 = por %p180, %p181
      %p184 = scmp.ne.s32.totalorder %s169, %s183
      %p185 = scmp.eq.s32.totalorder %s19, 0
      %p186 = por %p184, %p185
      %s187 = ssub.s32 %s20, %s32
      %s188 = ssub.s32 %s21, %s28
      %s189 = sor.u32 %s187, %s188
      %p190 = scmp.eq.s32.totalorder %s189, 0
      %s192 = sadd.s32 %s191, 1
      %s193 = scalar_select %p190, %s191, %s192
      %p196 = pneg %p190
      %p197 = scmp.eq.s32.totalorder %s13, 3
      %p198 = por %p196, %p197
      %p199 = scmp.ne.s32.totalorder %s191, %s194
      %p200 = scmp.eq.s32.totalorder %s13, 0
      %p201 = por %p199, %p200
      %p202 = scmp.ne.s32.totalorder %s191, %s194
      %p203 = scmp.eq.s32.totalorder %s18, 3
      %p204 = por %p202, %p203
      %p205 = scmp.ne.s32.totalorder %s194, %s195
      %p206 = scmp.eq.s32.totalorder %s18, 0
      %p207 = por %p205, %p206
      %p208 = scmp.ne.s32.totalorder %s194, %s195
      %p209 = scmp.eq.s32.totalorder %s19, 3
      %p210 = por %p208, %p209
      %p212 = scmp.ne.s32.totalorder %s195, %s211
      %p213 = scmp.eq.s32.totalorder %s19, 0
      %p214 = por %p212, %p213
      %p215 = scmp.le.s32.totalorder 1, %s13
      %p216 = scmp.lt.s32.totalorder %s13, 5
      %p217 = pnand %p215, %p216
      %p218 = pneg %p217
      // Predicated region
      $region9: #{operation_net_forward.1} parent=5 // pred_check
        _
      $region10: #{operation_net_forward.1} parent=5 // pred_check_branch
        %220 = sbr.rel (%p217) target = $region12
      $region11: #{operation_net_forward.1} parent=5 // pred_region
        %s221 = ssub.s32 %s13, 1
        // Predicated region
        $region13: #{operation_net_forward.1} parent=11 // pred_check
          %p222 = pneg %p74
        $region14: #{operation_net_forward.1} parent=11 // pred_check_branch
          %224 = sbr.rel (%p222) target = $region16
        $region15: #{operation_net_forward.1} parent=11 // pred_region
          _
        $region16: #{operation_net_forward.1} parent=11 // pred_fallthru
          _
        // Predicated region
        $region17: #{operation_net_forward.1} parent=11 // pred_check
          %p225 = pneg %p95
        $region18: #{operation_net_forward.1} parent=11 // pred_check_branch
          %227 = sbr.rel (%p225) target = $region20
        $region19: #{operation_net_forward.1} parent=11 // pred_region
          _
        $region20: #{operation_net_forward.1} parent=11 // pred_fallthru
          _
        // Predicated region
        $region21: #{operation_net_forward.1} parent=11 // pred_check
          %p228 = pneg %p116
        $region22: #{operation_net_forward.1} parent=11 // pred_check_branch
          %230 = sbr.rel (%p228) target = $region24
        $region23: #{operation_net_forward.1} parent=11 // pred_region
          _
        $region24: #{operation_net_forward.1} parent=11 // pred_fallthru
          _
        // Predicated region
        $region25: #{operation_net_forward.1} parent=11 // pred_check
          %p231 = pneg %p137
        $region26: #{operation_net_forward.1} parent=11 // pred_check_branch
          %233 = sbr.rel (%p231) target = $region28
        $region27: #{operation_net_forward.1} parent=11 // pred_region
          _
        $region28: #{operation_net_forward.1} parent=11 // pred_fallthru
          _
        // Predicated region
        $region29: #{operation_net_forward.1} parent=11 // pred_check
          %p234 = pneg %p158
        $region30: #{operation_net_forward.1} parent=11 // pred_check_branch
          %236 = sbr.rel (%p234) target = $region32
        $region31: #{operation_net_forward.1} parent=11 // pred_region
          _
        $region32: #{operation_net_forward.1} parent=11 // pred_fallthru
          _
        // Predicated region
        $region33: #{operation_net_forward.1} parent=11 // pred_check
          %p237 = pneg %p179
        $region34: #{operation_net_forward.1} parent=11 // pred_check_branch
          %239 = sbr.rel (%p237) target = $region36
        $region35: #{operation_net_forward.1} parent=11 // pred_region
          _
        $region36: #{operation_net_forward.1} parent=11 // pred_fallthru
          _
      $region12: #{operation_net_forward.1} parent=5 // pred_fallthru
        _
      %p240 = scmp.lt.s32.totalorder %s13, 4
      // Predicated region
      $region37: #{operation_net_forward.1} parent=5 // pred_check
        %p241 = pneg %p240
      $region38: #{operation_net_forward.1} parent=5 // pred_check_branch
        %243 = sbr.rel (%p241) target = $region40
      $region39: #{operation_net_forward.1} parent=5 // pred_region
        // Predicated region
        $region41: #{operation_net_forward.1} parent=39 // pred_check
          %p244 = pneg %p47
        $region42: #{operation_net_forward.1} parent=39 // pred_check_branch
          %246 = sbr.rel (%p244) target = $region44
        $region43: #{operation_net_forward.1} parent=39 // pred_region
          %s247 = sand.u32 %s37, 1
          %s248 = sand.u32 %s37, 1
          %s249 = smul.addr %s248, 512
          %s250 = scalar_lea.vmem [#allocation2], %s249
          %s251 = smul.u32 4, %s21
          %s252 = smul.addr %s20, 256
          %s253 = sadd.s32 %s251, %s252
          %s254 = smul.addr %s253, 4
          %s255 = scalar_lea.vmem %s0, %s254
          // Predicated region
          $region45: #{operation_net_forward.1} parent=43 // pred_check
            _
          $region46: #{operation_net_forward.1} parent=43 // pred_check_branch
            %257 = sbr.rel (0) target = $region48
          $region47: #{operation_net_forward.1} parent=43 // pred_region
            // Predicated region
            $region49: #{operation_net_forward.1} parent=47 // pred_check
              _
            $region50: #{operation_net_forward.1} parent=47 // pred_check_branch
              %259 = sbr.rel (0) target = $region52
            $region51: #{operation_net_forward.1} parent=47 // pred_region
              loop: start=0, step=1, limit=1
              $region53: #{operation_net_forward.1} parent=51 // loop_pre_header
                _
              $region54: #{operation_net_forward.1} parent=51 // loop_header
                %s261 = sphi 0, %s265
                %p262 = scmp.ge.s32.totalorder %s261, 1
                %s266 = sphi %s255, %s255
                %s267 = sphi %s250, %s250
              $region55: #{operation_net_forward.1} parent=51 // loop_header_branch
                %264 = sbr.rel (%p262) target = $region59
              $region56: #{operation_net_forward.1} parent=51 // loop_body
                %v268 = vld [vmem:[%s266] sm:$0xff]
                %269 = vst [vmem:[%s267] sm:$0xff] %v268
                %v270 = vld [vmem:[%s266 + $0x8] sm:$0xff]
                %271 = vst [vmem:[%s267 + $0x8] sm:$0xff] %v270
                %v272 = vld [vmem:[%s266 + $0x20] sm:$0xff]
                %273 = vst [vmem:[%s267 + $0x10] sm:$0xff] %v272
                %v274 = vld [vmem:[%s266 + $0x28] sm:$0xff]
                %275 = vst [vmem:[%s267 + $0x18] sm:$0xff] %v274
                %v276 = vld [vmem:[%s266 + $0x40] sm:$0xff]
                %277 = vst [vmem:[%s267 + $0x20] sm:$0xff] %v276
                %v278 = vld [vmem:[%s266 + $0x48] sm:$0xff]
                %279 = vst [vmem:[%s267 + $0x28] sm:$0xff] %v278
                %v280 = vld [vmem:[%s266 + $0x60] sm:$0xff]
                %281 = vst [vmem:[%s267 + $0x30] sm:$0xff] %v280
                %v282 = vld [vmem:[%s266 + $0x68] sm:$0xff]
                %283 = vst [vmem:[%s267 + $0x38] sm:$0xff] %v282
                %v284 = vld [vmem:[%s266 + $0x80] sm:$0xff]
                %285 = vst [vmem:[%s267 + $0x40] sm:$0xff] %v284
                %v286 = vld [vmem:[%s266 + $0x88] sm:$0xff]
                %287 = vst [vmem:[%s267 + $0x48] sm:$0xff] %v286
                %v288 = vld [vmem:[%s266 + $0xa0] sm:$0xff]
                %289 = vst [vmem:[%s267 + $0x50] sm:$0xff] %v288
                %v290 = vld [vmem:[%s266 + $0xa8] sm:$0xff]
                %291 = vst [vmem:[%s267 + $0x58] sm:$0xff] %v290
                %v292 = vld [vmem:[%s266 + $0xc0] sm:$0xff]
                %293 = vst [vmem:[%s267 + $0x60] sm:$0xff] %v292
                %v294 = vld [vmem:[%s266 + $0xc8] sm:$0xff]
                %295 = vst [vmem:[%s267 + $0x68] sm:$0xff] %v294
                %v296 = vld [vmem:[%s266 + $0xe0] sm:$0xff]
                %297 = vst [vmem:[%s267 + $0x70] sm:$0xff] %v296
                %v298 = vld [vmem:[%s266 + $0xe8] sm:$0xff]
                %299 = vst [vmem:[%s267 + $0x78] sm:$0xff] %v298
                %v300 = vld [vmem:[%s266 + $0x100] sm:$0xff]
                %301 = vst [vmem:[%s267 + $0x80] sm:$0xff] %v300
                %v302 = vld [vmem:[%s266 + $0x108] sm:$0xff]
                %303 = vst [vmem:[%s267 + $0x88] sm:$0xff] %v302
                %v304 = vld [vmem:[%s266 + $0x120] sm:$0xff]
                %305 = vst [vmem:[%s267 + $0x90] sm:$0xff] %v304
                %v306 = vld [vmem:[%s266 + $0x128] sm:$0xff]
                %307 = vst [vmem:[%s267 + $0x98] sm:$0xff] %v306
                %v308 = vld [vmem:[%s266 + $0x140] sm:$0xff]
                %309 = vst [vmem:[%s267 + $0xa0] sm:$0xff] %v308
                %v310 = vld [vmem:[%s266 + $0x148] sm:$0xff]
                %311 = vst [vmem:[%s267 + $0xa8] sm:$0xff] %v310
                %v312 = vld [vmem:[%s266 + $0x160] sm:$0xff]
                %313 = vst [vmem:[%s267 + $0xb0] sm:$0xff] %v312
                %v314 = vld [vmem:[%s266 + $0x168] sm:$0xff]
                %315 = vst [vmem:[%s267 + $0xb8] sm:$0xff] %v314
                %v316 = vld [vmem:[%s266 + $0x180] sm:$0xff]
                %317 = vst [vmem:[%s267 + $0xc0] sm:$0xff] %v316
                %v318 = vld [vmem:[%s266 + $0x188] sm:$0xff]
                %319 = vst [vmem:[%s267 + $0xc8] sm:$0xff] %v318
                %v320 = vld [vmem:[%s266 + $0x1a0] sm:$0xff]
                %321 = vst [vmem:[%s267 + $0xd0] sm:$0xff] %v320
                %v322 = vld [vmem:[%s266 + $0x1a8] sm:$0xff]
                %323 = vst [vmem:[%s267 + $0xd8] sm:$0xff] %v322
                %v324 = vld [vmem:[%s266 + $0x1c0] sm:$0xff]
                %325 = vst [vmem:[%s267 + $0xe0] sm:$0xff] %v324
                %v326 = vld [vmem:[%s266 + $0x1c8] sm:$0xff]
                %327 = vst [vmem:[%s267 + $0xe8] sm:$0xff] %v326
                %v328 = vld [vmem:[%s266 + $0x1e0] sm:$0xff]
                %329 = vst [vmem:[%s267 + $0xf0] sm:$0xff] %v328
                %v330 = vld [vmem:[%s266 + $0x1e8] sm:$0xff]
                %331 = vst [vmem:[%s267 + $0xf8] sm:$0xff] %v330
                %v332 = vld [vmem:[%s266 + $0x200] sm:$0xff]
                %333 = vst [vmem:[%s267 + $0x100] sm:$0xff] %v332
                %v334 = vld [vmem:[%s266 + $0x208] sm:$0xff]
                %335 = vst [vmem:[%s267 + $0x108] sm:$0xff] %v334
                %v336 = vld [vmem:[%s266 + $0x220] sm:$0xff]
                %337 = vst [vmem:[%s267 + $0x110] sm:$0xff] %v336
                %v338 = vld [vmem:[%s266 + $0x228] sm:$0xff]
                %339 = vst [vmem:[%s267 + $0x118] sm:$0xff] %v338
                %v340 = vld [vmem:[%s266 + $0x240] sm:$0xff]
                %341 = vst [vmem:[%s267 + $0x120] sm:$0xff] %v340
                %v342 = vld [vmem:[%s266 + $0x248] sm:$0xff]
                %343 = vst [vmem:[%s267 + $0x128] sm:$0xff] %v342
                %v344 = vld [vmem:[%s266 + $0x260] sm:$0xff]
                %345 = vst [vmem:[%s267 + $0x130] sm:$0xff] %v344
                %v346 = vld [vmem:[%s266 + $0x268] sm:$0xff]
                %347 = vst [vmem:[%s267 + $0x138] sm:$0xff] %v346
                %v348 = vld [vmem:[%s266 + $0x280] sm:$0xff]
                %349 = vst [vmem:[%s267 + $0x140] sm:$0xff] %v348
                %v350 = vld [vmem:[%s266 + $0x288] sm:$0xff]
                %351 = vst [vmem:[%s267 + $0x148] sm:$0xff] %v350
                %v352 = vld [vmem:[%s266 + $0x2a0] sm:$0xff]
                %353 = vst [vmem:[%s267 + $0x150] sm:$0xff] %v352
                %v354 = vld [vmem:[%s266 + $0x2a8] sm:$0xff]
                %355 = vst [vmem:[%s267 + $0x158] sm:$0xff] %v354
                %v356 = vld [vmem:[%s266 + $0x2c0] sm:$0xff]
                %357 = vst [vmem:[%s267 + $0x160] sm:$0xff] %v356
                %v358 = vld [vmem:[%s266 + $0x2c8] sm:$0xff]
                %359 = vst [vmem:[%s267 + $0x168] sm:$0xff] %v358
                %v360 = vld [vmem:[%s266 + $0x2e0] sm:$0xff]
                %361 = vst [vmem:[%s267 + $0x170] sm:$0xff] %v360
                %v362 = vld [vmem:[%s266 + $0x2e8] sm:$0xff]
                %363 = vst [vmem:[%s267 + $0x178] sm:$0xff] %v362
                %v364 = vld [vmem:[%s266 + $0x300] sm:$0xff]
                %365 = vst [vmem:[%s267 + $0x180] sm:$0xff] %v364
                %v366 = vld [vmem:[%s266 + $0x308] sm:$0xff]
                %367 = vst [vmem:[%s267 + $0x188] sm:$0xff] %v366
                %v368 = vld [vmem:[%s266 + $0x320] sm:$0xff]
                %369 = vst [vmem:[%s267 + $0x190] sm:$0xff] %v368
                %v370 = vld [vmem:[%s266 + $0x328] sm:$0xff]
                %371 = vst [vmem:[%s267 + $0x198] sm:$0xff] %v370
                %v372 = vld [vmem:[%s266 + $0x340] sm:$0xff]
                %373 = vst [vmem:[%s267 + $0x1a0] sm:$0xff] %v372
                %v374 = vld [vmem:[%s266 + $0x348] sm:$0xff]
                %375 = vst [vmem:[%s267 + $0x1a8] sm:$0xff] %v374
                %v376 = vld [vmem:[%s266 + $0x360] sm:$0xff]
                %377 = vst [vmem:[%s267 + $0x1b0] sm:$0xff] %v376
                %v378 = vld [vmem:[%s266 + $0x368] sm:$0xff]
                %379 = vst [vmem:[%s267 + $0x1b8] sm:$0xff] %v378
                %v380 = vld [vmem:[%s266 + $0x380] sm:$0xff]
                %381 = vst [vmem:[%s267 + $0x1c0] sm:$0xff] %v380
                %v382 = vld [vmem:[%s266 + $0x388] sm:$0xff]
                %383 = vst [vmem:[%s267 + $0x1c8] sm:$0xff] %v382
                %v384 = vld [vmem:[%s266 + $0x3a0] sm:$0xff]
                %385 = vst [vmem:[%s267 + $0x1d0] sm:$0xff] %v384
                %v386 = vld [vmem:[%s266 + $0x3a8] sm:$0xff]
                %387 = vst [vmem:[%s267 + $0x1d8] sm:$0xff] %v386
                %v388 = vld [vmem:[%s266 + $0x3c0] sm:$0xff]
                %389 = vst [vmem:[%s267 + $0x1e0] sm:$0xff] %v388
                %v390 = vld [vmem:[%s266 + $0x3c8] sm:$0xff]
                %391 = vst [vmem:[%s267 + $0x1e8] sm:$0xff] %v390
                %v392 = vld [vmem:[%s266 + $0x3e0] sm:$0xff]
                %393 = vst [vmem:[%s267 + $0x1f0] sm:$0xff] %v392
                %v394 = vld [vmem:[%s266 + $0x3e8] sm:$0xff]
                %395 = vst [vmem:[%s267 + $0x1f8] sm:$0xff] %v394
              $region57: #{operation_net_forward.1} parent=51 // loop_footer
                %s265 = sadd.s32 1, %s261
              $region58: #{operation_net_forward.1} parent=51 // loop_footer_branch
                %260 = sbr.rel target = $region54
              $region59: #{operation_net_forward.1} parent=51 // loop_exit
                _
            $region52: #{operation_net_forward.1} parent=47 // pred_fallthru
              _
            // Predicated region
            $region60: #{operation_net_forward.1} parent=47 // pred_check
              _
            $region61: #{operation_net_forward.1} parent=47 // pred_check_branch
              %397 = sbr.rel target = $region63
            $region62: #{operation_net_forward.1} parent=47 // pred_region
              _
            $region63: #{operation_net_forward.1} parent=47 // pred_fallthru
              _
          $region48: #{operation_net_forward.1} parent=43 // pred_fallthru
            _
          %398 = vnop
        $region44: #{operation_net_forward.1} parent=39 // pred_fallthru
          _
      $region40: #{operation_net_forward.1} parent=5 // pred_fallthru
        _
      %p399 = scmp.le.s32.totalorder 1, %s13
      %p400 = scmp.lt.s32.totalorder %s13, 5
      %p401 = pnand %p399, %p400
      %p402 = pneg %p401
      // Predicated region
      $region64: #{operation_net_forward.1} parent=5 // pred_check
        _
      $region65: #{operation_net_forward.1} parent=5 // pred_check_branch
        %404 = sbr.rel (%p401) target = $region67
      $region66: #{operation_net_forward.1} parent=5 // pred_region
        %s405 = ssub.s32 %s13, 1
        %s406 = sand.u32 %s40, 1
        %s407 = sand.u32 %s40, 1
        %s408 = smul.addr %s407, 512
        %s409 = scalar_lea.vmem [#allocation2], %s408
        // Predicated region
        $region68: #{operation_net_forward.1} parent=66 // pred_check
          %p410 = pneg %p53
        $region69: #{operation_net_forward.1} parent=66 // pred_check_branch
          %412 = sbr.rel (%p410) target = $region71
        $region70: #{operation_net_forward.1} parent=66 // pred_region
          _
        $region71: #{operation_net_forward.1} parent=66 // pred_fallthru
          _
        %s413 = sand.u32 %s40, 1
        %s414 = sand.u32 %s40, 1
        %s415 = smul.addr %s414, 512
        %s416 = scalar_lea.vmem [#allocation2], %s415
        %p417 = pneg %p53
        %p418 = pneg %p50
        %p419 = pneg %p74
        %p420 = pneg %p71
        %p421 = pneg %p95
        %p422 = pneg %p92
        %p423 = pneg %p116
        %p424 = pneg %p113
        %p425 = pneg %p137
        %p426 = pneg %p134
        %p427 = pneg %p158
        %p428 = pneg %p155
        %p429 = pneg %p179
        %p430 = pneg %p176
        %p431 = pneg %p207
        %p432 = pneg %p204
        %s433 = sand.u32 %s194, 1
        %s434 = sand.u32 %s194, 1
        %s435 = smul.addr %s434, 160
        %s436 = scalar_lea.vmem [#allocation3], %s435
        %s437 = smul.u32 4, %s23
        %s438 = smul.u32 4, %s23
        %v440 = vld [vmem:[%s409] sm:$0xff]
        %v441 = vld [vmem:[%s409 + $0x8] sm:$0xff]
        %v442 = vld [vmem:[%s409 + $0x10] sm:$0xff]
        %v443 = vld [vmem:[%s409 + $0x18] sm:$0xff]
        %v444 = vld [vmem:[%s409 + $0x20] sm:$0xff]
        %v445 = vld [vmem:[%s409 + $0x28] sm:$0xff]
        %v446 = vld [vmem:[%s409 + $0x30] sm:$0xff]
        %v447 = vld [vmem:[%s409 + $0x38] sm:$0xff]
        %v448 = vld [vmem:[%s409 + $0x40] sm:$0xff]
        %v449 = vld [vmem:[%s409 + $0x48] sm:$0xff]
        %v450 = vld [vmem:[%s409 + $0x50] sm:$0xff]
        %v451 = vld [vmem:[%s409 + $0x58] sm:$0xff]
        %v452 = vld [vmem:[%s409 + $0x60] sm:$0xff]
        %v453 = vld [vmem:[%s409 + $0x68] sm:$0xff]
        %v454 = vld [vmem:[%s409 + $0x70] sm:$0xff]
        %v455 = vld [vmem:[%s409 + $0x78] sm:$0xff]
        %v456 = vld [vmem:[%s409 + $0x80] sm:$0xff]
        %v457 = vld [vmem:[%s409 + $0x88] sm:$0xff]
        %v458 = vld [vmem:[%s409 + $0x90] sm:$0xff]
        %v459 = vld [vmem:[%s409 + $0x98] sm:$0xff]
        %v460 = vld [vmem:[%s409 + $0xa0] sm:$0xff]
        %v461 = vld [vmem:[%s409 + $0xa8] sm:$0xff]
        %v462 = vld [vmem:[%s409 + $0xb0] sm:$0xff]
        %v463 = vld [vmem:[%s409 + $0xb8] sm:$0xff]
        %v464 = vld [vmem:[%s409 + $0xc0] sm:$0xff]
        %v465 = vld [vmem:[%s409 + $0xc8] sm:$0xff]
        %v466 = vld [vmem:[%s409 + $0xd0] sm:$0xff]
        %v467 = vld [vmem:[%s409 + $0xd8] sm:$0xff]
        %v468 = vld [vmem:[%s409 + $0xe0] sm:$0xff]
        %v469 = vld [vmem:[%s409 + $0xe8] sm:$0xff]
        %v470 = vld [vmem:[%s409 + $0xf0] sm:$0xff]
        %v471 = vld [vmem:[%s409 + $0xf8] sm:$0xff]
        %v472 = vld [vmem:[%s409 + $0x100] sm:$0xff]
        %v473 = vld [vmem:[%s409 + $0x108] sm:$0xff]
        %v474 = vld [vmem:[%s409 + $0x110] sm:$0xff]
        %v475 = vld [vmem:[%s409 + $0x118] sm:$0xff]
        %v476 = vld [vmem:[%s409 + $0x120] sm:$0xff]
        %v477 = vld [vmem:[%s409 + $0x128] sm:$0xff]
        %v478 = vld [vmem:[%s409 + $0x130] sm:$0xff]
        %v479 = vld [vmem:[%s409 + $0x138] sm:$0xff]
        %v480 = vld [vmem:[%s409 + $0x140] sm:$0xff]
        %v481 = vld [vmem:[%s409 + $0x148] sm:$0xff]
        %v482 = vld [vmem:[%s409 + $0x150] sm:$0xff]
        %v483 = vld [vmem:[%s409 + $0x158] sm:$0xff]
        %v484 = vld [vmem:[%s409 + $0x160] sm:$0xff]
        %v485 = vld [vmem:[%s409 + $0x168] sm:$0xff]
        %v486 = vld [vmem:[%s409 + $0x170] sm:$0xff]
        %v487 = vld [vmem:[%s409 + $0x178] sm:$0xff]
        %v488 = vld [vmem:[%s409 + $0x180] sm:$0xff]
        %v489 = vld [vmem:[%s409 + $0x188] sm:$0xff]
        %v490 = vld [vmem:[%s409 + $0x190] sm:$0xff]
        %v491 = vld [vmem:[%s409 + $0x198] sm:$0xff]
        %v492 = vld [vmem:[%s409 + $0x1a0] sm:$0xff]
        %v493 = vld [vmem:[%s409 + $0x1a8] sm:$0xff]
        %v494 = vld [vmem:[%s409 + $0x1b0] sm:$0xff]
        %v495 = vld [vmem:[%s409 + $0x1b8] sm:$0xff]
        %v496 = vld [vmem:[%s409 + $0x1c0] sm:$0xff]
        %v497 = vld [vmem:[%s409 + $0x1c8] sm:$0xff]
        %v498 = vld [vmem:[%s409 + $0x1d0] sm:$0xff]
        %v499 = vld [vmem:[%s409 + $0x1d8] sm:$0xff]
        %v500 = vld [vmem:[%s409 + $0x1e0] sm:$0xff]
        %v501 = vld [vmem:[%s409 + $0x1e8] sm:$0xff]
        %v502 = vld [vmem:[%s409 + $0x1f0] sm:$0xff]
        %v503 = vld [vmem:[%s409 + $0x1f8] sm:$0xff]
        %v504 = vld [vmem:[%s1] sm:$0xff]
        %v505 = vld [vmem:[%s1 + $0x8] sm:$0xff]
        %v506 = vld [vmem:[%s1 + $0x10] sm:$0xff]
        %v507 = vld [vmem:[%s1 + $0x18] sm:$0xff]
        %v508 = vld [vmem:[%s1 + $0x20] sm:$0xff]
        %v509 = vld [vmem:[%s1 + $0x28] sm:$0xff]
        %v510 = vld [vmem:[%s1 + $0x30] sm:$0xff]
        %v511 = vld [vmem:[%s1 + $0x38] sm:$0xff]
        %v512 = vld [vmem:[%s1 + $0x40] sm:$0xff]
        %v513 = vld [vmem:[%s1 + $0x48] sm:$0xff]
        %v514 = vld [vmem:[%s1 + $0x50] sm:$0xff]
        %v515 = vld [vmem:[%s1 + $0x58] sm:$0xff]
        %v516 = vld [vmem:[%s1 + $0x60] sm:$0xff]
        %v517 = vld [vmem:[%s1 + $0x68] sm:$0xff]
        %v518 = vld [vmem:[%s1 + $0x70] sm:$0xff]
        %v519 = vld [vmem:[%s1 + $0x78] sm:$0xff]
        %v520 = vld [vmem:[%s2] sm:$0xff]
        %v521 = vld [vmem:[%s2 + $0x8] sm:$0xff]
        %v522 = vld [vmem:[%s2 + $0x10] sm:$0xff]
        %v523 = vld [vmem:[%s2 + $0x18] sm:$0xff]
        %v524 = vld [vmem:[%s2 + $0x20] sm:$0xff]
        %v525 = vld [vmem:[%s2 + $0x28] sm:$0xff]
        %v526 = vld [vmem:[%s2 + $0x30] sm:$0xff]
        %v527 = vld [vmem:[%s2 + $0x38] sm:$0xff]
        %v528 = vld [vmem:[%s2 + $0x40] sm:$0xff]
        %v529 = vld [vmem:[%s2 + $0x48] sm:$0xff]
        %v530 = vld [vmem:[%s2 + $0x50] sm:$0xff]
        %v531 = vld [vmem:[%s2 + $0x58] sm:$0xff]
        %v532 = vld [vmem:[%s2 + $0x60] sm:$0xff]
        %v533 = vld [vmem:[%s2 + $0x68] sm:$0xff]
        %v534 = vld [vmem:[%s2 + $0x70] sm:$0xff]
        %v535 = vld [vmem:[%s2 + $0x78] sm:$0xff]
        %537 = vset.pattern.permute.xlu0 0
        %538 = vperm.xlu0 %537, %v520
        %v539 = vpop.permute.xlu0 %538
        %542 = vset.pattern.permute.xlu0 0
        %543 = vperm.xlu0 %542, %v521
        %v544 = vpop.permute.xlu0 %543
        %547 = vset.pattern.permute.xlu0 0
        %548 = vperm.xlu0 %547, %v522
        %v549 = vpop.permute.xlu0 %548
        %552 = vset.pattern.permute.xlu0 0
        %553 = vperm.xlu0 %552, %v523
        %v554 = vpop.permute.xlu0 %553
        %557 = vset.pattern.permute.xlu0 0
        %558 = vperm.xlu0 %557, %v524
        %v559 = vpop.permute.xlu0 %558
        %562 = vset.pattern.permute.xlu0 0
        %563 = vperm.xlu0 %562, %v525
        %v564 = vpop.permute.xlu0 %563
        %567 = vset.pattern.permute.xlu0 0
        %568 = vperm.xlu0 %567, %v526
        %v569 = vpop.permute.xlu0 %568
        %572 = vset.pattern.permute.xlu0 0
        %573 = vperm.xlu0 %572, %v527
        %v574 = vpop.permute.xlu0 %573
        %577 = vset.pattern.permute.xlu0 0
        %578 = vperm.xlu0 %577, %v528
        %v579 = vpop.permute.xlu0 %578
        %582 = vset.pattern.permute.xlu0 0
        %583 = vperm.xlu0 %582, %v529
        %v584 = vpop.permute.xlu0 %583
        %587 = vset.pattern.permute.xlu0 0
        %588 = vperm.xlu0 %587, %v530
        %v589 = vpop.permute.xlu0 %588
        %592 = vset.pattern.permute.xlu0 0
        %593 = vperm.xlu0 %592, %v531
        %v594 = vpop.permute.xlu0 %593
        %597 = vset.pattern.permute.xlu0 0
        %598 = vperm.xlu0 %597, %v532
        %v599 = vpop.permute.xlu0 %598
        %602 = vset.pattern.permute.xlu0 0
        %603 = vperm.xlu0 %602, %v533
        %v604 = vpop.permute.xlu0 %603
        %607 = vset.pattern.permute.xlu0 0
        %608 = vperm.xlu0 %607, %v534
        %v609 = vpop.permute.xlu0 %608
        %612 = vset.pattern.permute.xlu0 0
        %613 = vperm.xlu0 %612, %v535
        %v614 = vpop.permute.xlu0 %613
        %v632 = vunpack.c.l.b16 %v504
        %v633 = vunpack.c.h.b16 %v504
        %v634 = vunpack.c.l.b16 %v505
        %v635 = vunpack.c.h.b16 %v505
        %v636 = vunpack.c.l.b16 %v506
        %v637 = vunpack.c.h.b16 %v506
        %v638 = vunpack.c.l.b16 %v507
        %v639 = vunpack.c.h.b16 %v507
        %v640 = vunpack.c.l.b16 %v508
        %v641 = vunpack.c.h.b16 %v508
        %v642 = vunpack.c.l.b16 %v509
        %v643 = vunpack.c.h.b16 %v509
        %v644 = vunpack.c.l.b16 %v510
        %v645 = vunpack.c.h.b16 %v510
        %v646 = vunpack.c.l.b16 %v511
        %v647 = vunpack.c.h.b16 %v511
        %v648 = vunpack.c.l.b16 %v512
        %v649 = vunpack.c.h.b16 %v512
        %v650 = vunpack.c.l.b16 %v513
        %v651 = vunpack.c.h.b16 %v513
        %v652 = vunpack.c.l.b16 %v514
        %v653 = vunpack.c.h.b16 %v514
        %v654 = vunpack.c.l.b16 %v515
        %v655 = vunpack.c.h.b16 %v515
        %v656 = vunpack.c.l.b16 %v516
        %v657 = vunpack.c.h.b16 %v516
        %v658 = vunpack.c.l.b16 %v517
        %v659 = vunpack.c.h.b16 %v517
        %v660 = vunpack.c.l.b16 %v518
        %v661 = vunpack.c.h.b16 %v518
        %v662 = vunpack.c.l.b16 %v519
        %v663 = vunpack.c.h.b16 %v519
        %v664 = vpack.c.b16 %v634, %v632
        %v665 = vpack.c.b16 %v635, %v633
        %v666 = vpack.c.b16 %v638, %v636
        %v667 = vpack.c.b16 %v639, %v637
        %v668 = vpack.c.b16 %v642, %v640
        %v669 = vpack.c.b16 %v643, %v641
        %v670 = vpack.c.b16 %v646, %v644
        %v671 = vpack.c.b16 %v647, %v645
        %v672 = vpack.c.b16 %v650, %v648
        %v673 = vpack.c.b16 %v651, %v649
        %v674 = vpack.c.b16 %v654, %v652
        %v675 = vpack.c.b16 %v655, %v653
        %v676 = vpack.c.b16 %v658, %v656
        %v677 = vpack.c.b16 %v659, %v657
        %v678 = vpack.c.b16 %v662, %v660
        %v679 = vpack.c.b16 %v663, %v661
        %v760 = vunpack.c.l.b16 %v440
        %v761 = vunpack.c.h.b16 %v440
        %v762 = vunpack.c.l.b16 %v441
        %v763 = vunpack.c.h.b16 %v441
        %v764 = vunpack.c.l.b16 %v442
        %v765 = vunpack.c.h.b16 %v442
        %v766 = vunpack.c.l.b16 %v443
        %v767 = vunpack.c.h.b16 %v443
        %v768 = vunpack.c.l.b16 %v444
        %v769 = vunpack.c.h.b16 %v444
        %v770 = vunpack.c.l.b16 %v445
        %v771 = vunpack.c.h.b16 %v445
        %v772 = vunpack.c.l.b16 %v446
        %v773 = vunpack.c.h.b16 %v446
        %v774 = vunpack.c.l.b16 %v447
        %v775 = vunpack.c.h.b16 %v447
        %v776 = vunpack.c.l.b16 %v448
        %v777 = vunpack.c.h.b16 %v448
        %v778 = vunpack.c.l.b16 %v449
        %v779 = vunpack.c.h.b16 %v449
        %v780 = vunpack.c.l.b16 %v450
        %v781 = vunpack.c.h.b16 %v450
        %v782 = vunpack.c.l.b16 %v451
        %v783 = vunpack.c.h.b16 %v451
        %v784 = vunpack.c.l.b16 %v452
        %v785 = vunpack.c.h.b16 %v452
        %v786 = vunpack.c.l.b16 %v453
        %v787 = vunpack.c.h.b16 %v453
        %v788 = vunpack.c.l.b16 %v454
        %v789 = vunpack.c.h.b16 %v454
        %v790 = vunpack.c.l.b16 %v455
        %v791 = vunpack.c.h.b16 %v455
        %v792 = vunpack.c.l.b16 %v456
        %v793 = vunpack.c.h.b16 %v456
        %v794 = vunpack.c.l.b16 %v457
        %v795 = vunpack.c.h.b16 %v457
        %v796 = vunpack.c.l.b16 %v458
        %v797 = vunpack.c.h.b16 %v458
        %v798 = vunpack.c.l.b16 %v459
        %v799 = vunpack.c.h.b16 %v459
        %v800 = vunpack.c.l.b16 %v460
        %v801 = vunpack.c.h.b16 %v460
        %v802 = vunpack.c.l.b16 %v461
        %v803 = vunpack.c.h.b16 %v461
        %v804 = vunpack.c.l.b16 %v462
        %v805 = vunpack.c.h.b16 %v462
        %v806 = vunpack.c.l.b16 %v463
        %v807 = vunpack.c.h.b16 %v463
        %v808 = vunpack.c.l.b16 %v464
        %v809 = vunpack.c.h.b16 %v464
        %v810 = vunpack.c.l.b16 %v465
        %v811 = vunpack.c.h.b16 %v465
        %v812 = vunpack.c.l.b16 %v466
        %v813 = vunpack.c.h.b16 %v466
        %v814 = vunpack.c.l.b16 %v467
        %v815 = vunpack.c.h.b16 %v467
        %v816 = vunpack.c.l.b16 %v468
        %v817 = vunpack.c.h.b16 %v468
        %v818 = vunpack.c.l.b16 %v469
        %v819 = vunpack.c.h.b16 %v469
        %v820 = vunpack.c.l.b16 %v470
        %v821 = vunpack.c.h.b16 %v470
        %v822 = vunpack.c.l.b16 %v471
        %v823 = vunpack.c.h.b16 %v471
        %v824 = vunpack.c.l.b16 %v472
        %v825 = vunpack.c.h.b16 %v472
        %v826 = vunpack.c.l.b16 %v473
        %v827 = vunpack.c.h.b16 %v473
        %v828 = vunpack.c.l.b16 %v474
        %v829 = vunpack.c.h.b16 %v474
        %v830 = vunpack.c.l.b16 %v475
        %v831 = vunpack.c.h.b16 %v475
        %v832 = vunpack.c.l.b16 %v476
        %v833 = vunpack.c.h.b16 %v476
        %v834 = vunpack.c.l.b16 %v477
        %v835 = vunpack.c.h.b16 %v477
        %v836 = vunpack.c.l.b16 %v478
        %v837 = vunpack.c.h.b16 %v478
        %v838 = vunpack.c.l.b16 %v479
        %v839 = vunpack.c.h.b16 %v479
        %v840 = vunpack.c.l.b16 %v480
        %v841 = vunpack.c.h.b16 %v480
        %v842 = vunpack.c.l.b16 %v481
        %v843 = vunpack.c.h.b16 %v481
        %v844 = vunpack.c.l.b16 %v482
        %v845 = vunpack.c.h.b16 %v482
        %v846 = vunpack.c.l.b16 %v483
        %v847 = vunpack.c.h.b16 %v483
        %v848 = vunpack.c.l.b16 %v484
        %v849 = vunpack.c.h.b16 %v484
        %v850 = vunpack.c.l.b16 %v485
        %v851 = vunpack.c.h.b16 %v485
        %v852 = vunpack.c.l.b16 %v486
        %v853 = vunpack.c.h.b16 %v486
        %v854 = vunpack.c.l.b16 %v487
        %v855 = vunpack.c.h.b16 %v487
        %v856 = vunpack.c.l.b16 %v488
        %v857 = vunpack.c.h.b16 %v488
        %v858 = vunpack.c.l.b16 %v489
        %v859 = vunpack.c.h.b16 %v489
        %v860 = vunpack.c.l.b16 %v490
        %v861 = vunpack.c.h.b16 %v490
        %v862 = vunpack.c.l.b16 %v491
        %v863 = vunpack.c.h.b16 %v491
        %v864 = vunpack.c.l.b16 %v492
        %v865 = vunpack.c.h.b16 %v492
        %v866 = vunpack.c.l.b16 %v493
        %v867 = vunpack.c.h.b16 %v493
        %v868 = vunpack.c.l.b16 %v494
        %v869 = vunpack.c.h.b16 %v494
        %v870 = vunpack.c.l.b16 %v495
        %v871 = vunpack.c.h.b16 %v495
        %v872 = vunpack.c.l.b16 %v496
        %v873 = vunpack.c.h.b16 %v496
        %v874 = vunpack.c.l.b16 %v497
        %v875 = vunpack.c.h.b16 %v497
        %v876 = vunpack.c.l.b16 %v498
        %v877 = vunpack.c.h.b16 %v498
        %v878 = vunpack.c.l.b16 %v499
        %v879 = vunpack.c.h.b16 %v499
        %v880 = vunpack.c.l.b16 %v500
        %v881 = vunpack.c.h.b16 %v500
        %v882 = vunpack.c.l.b16 %v501
        %v883 = vunpack.c.h.b16 %v501
        %v884 = vunpack.c.l.b16 %v502
        %v885 = vunpack.c.h.b16 %v502
        %v886 = vunpack.c.l.b16 %v503
        %v887 = vunpack.c.h.b16 %v503
        %v888 = vpack.c.b16 %v764, %v760
        %v889 = vpack.c.b16 %v765, %v761
        %v890 = vpack.c.b16 %v766, %v762
        %v891 = vpack.c.b16 %v767, %v763
        %v892 = vpack.c.b16 %v772, %v768
        %v893 = vpack.c.b16 %v773, %v769
        %v894 = vpack.c.b16 %v774, %v770
        %v895 = vpack.c.b16 %v775, %v771
        %v896 = vpack.c.b16 %v780, %v776
        %v897 = vpack.c.b16 %v781, %v777
        %v898 = vpack.c.b16 %v782, %v778
        %v899 = vpack.c.b16 %v783, %v779
        %v900 = vpack.c.b16 %v788, %v784
        %v901 = vpack.c.b16 %v789, %v785
        %v902 = vpack.c.b16 %v790, %v786
        %v903 = vpack.c.b16 %v791, %v787
        %v904 = vpack.c.b16 %v796, %v792
        %v905 = vpack.c.b16 %v797, %v793
        %v906 = vpack.c.b16 %v798, %v794
        %v907 = vpack.c.b16 %v799, %v795
        %v908 = vpack.c.b16 %v804, %v800
        %v909 = vpack.c.b16 %v805, %v801
        %v910 = vpack.c.b16 %v806, %v802
        %v911 = vpack.c.b16 %v807, %v803
        %v912 = vpack.c.b16 %v812, %v808
        %v913 = vpack.c.b16 %v813, %v809
        %v914 = vpack.c.b16 %v814, %v810
        %v915 = vpack.c.b16 %v815, %v811
        %v916 = vpack.c.b16 %v820, %v816
        %v917 = vpack.c.b16 %v821, %v817
        %v918 = vpack.c.b16 %v822, %v818
        %v919 = vpack.c.b16 %v823, %v819
        %v920 = vpack.c.b16 %v828, %v824
        %v921 = vpack.c.b16 %v829, %v825
        %v922 = vpack.c.b16 %v830, %v826
        %v923 = vpack.c.b16 %v831, %v827
        %v924 = vpack.c.b16 %v836, %v832
        %v925 = vpack.c.b16 %v837, %v833
        %v926 = vpack.c.b16 %v838, %v834
        %v927 = vpack.c.b16 %v839, %v835
        %v928 = vpack.c.b16 %v844, %v840
        %v929 = vpack.c.b16 %v845, %v841
        %v930 = vpack.c.b16 %v846, %v842
        %v931 = vpack.c.b16 %v847, %v843
        %v932 = vpack.c.b16 %v852, %v848
        %v933 = vpack.c.b16 %v853, %v849
        %v934 = vpack.c.b16 %v854, %v850
        %v935 = vpack.c.b16 %v855, %v851
        %v936 = vpack.c.b16 %v860, %v856
        %v937 = vpack.c.b16 %v861, %v857
        %v938 = vpack.c.b16 %v862, %v858
        %v939 = vpack.c.b16 %v863, %v859
        %v940 = vpack.c.b16 %v868, %v864
        %v941 = vpack.c.b16 %v869, %v865
        %v942 = vpack.c.b16 %v870, %v866
        %v943 = vpack.c.b16 %v871, %v867
        %v944 = vpack.c.b16 %v876, %v872
        %v945 = vpack.c.b16 %v877, %v873
        %v946 = vpack.c.b16 %v878, %v874
        %v947 = vpack.c.b16 %v879, %v875
        %v948 = vpack.c.b16 %v884, %v880
        %v949 = vpack.c.b16 %v885, %v881
        %v950 = vpack.c.b16 %v886, %v882
        %v951 = vpack.c.b16 %v887, %v883
        %1016 = vmatprep.subr.bf16.mxu0 %v889
        %1017 = vmatpush1.bf16.msra.mxu0 %v888
        %1018 = vmatprep.subr.bf16.mxu0 %v893
        %1019 = vmatpush1.bf16.msra.mxu0 %v892
        %1020 = vmatprep.subr.bf16.mxu0 %v897
        %1021 = vmatpush1.bf16.msra.mxu0 %v896
        %1022 = vmatprep.subr.bf16.mxu0 %v901
        %1023 = vmatpush1.bf16.msra.mxu0 %v900
        %1024 = vmatprep.subr.bf16.mxu0 %v905
        %1025 = vmatpush1.bf16.msra.mxu0 %v904
        %1026 = vmatprep.subr.bf16.mxu0 %v909
        %1027 = vmatpush1.bf16.msra.mxu0 %v908
        %1028 = vmatprep.subr.bf16.mxu0 %v913
        %1029 = vmatpush1.bf16.msra.mxu0 %v912
        %1030 = vmatprep.subr.bf16.mxu0 %v917
        %1031 = vmatpush1.bf16.msra.mxu0 %v916
        %1032 = vmatprep.subr.bf16.mxu0 %v921
        %1033 = vmatpush1.bf16.msra.mxu0 %v920
        %1034 = vmatprep.subr.bf16.mxu0 %v925
        %1035 = vmatpush1.bf16.msra.mxu0 %v924
        %1036 = vmatprep.subr.bf16.mxu0 %v929
        %1037 = vmatpush1.bf16.msra.mxu0 %v928
        %1038 = vmatprep.subr.bf16.mxu0 %v933
        %1039 = vmatpush1.bf16.msra.mxu0 %v932
        %1040 = vmatprep.subr.bf16.mxu0 %v937
        %1041 = vmatpush1.bf16.msra.mxu0 %v936
        %1042 = vmatprep.subr.bf16.mxu0 %v941
        %1043 = vmatpush1.bf16.msra.mxu0 %v940
        %1044 = vmatprep.subr.bf16.mxu0 %v945
        %1045 = vmatpush1.bf16.msra.mxu0 %v944
        %1046 = vmatprep.subr.bf16.mxu0 %v949
        %1047 = vmatpush1.bf16.msra.mxu0 %v948
        %1048 = vmatprep.mubr.bf16.mxu0 %v665
        %1049 = vmatmul.mubr.bf16.gmra.mrb[0].mxu0 %v664
        %v1050 = vpop.f32.mrb[0].mxu0
        %v1051 = vadd.f32 %v539, %v1050
        %v1052 = vpop.f32.mrb[0].mxu0
        %v1053 = vadd.f32 %v539, %v1052
        %v1054 = vpop.f32.mrb[0].mxu0
        %v1055 = vadd.f32 %v544, %v1054
        %v1056 = vpop.f32.mrb[0].mxu0
        %v1057 = vadd.f32 %v544, %v1056
        %1058 = vmatprep.mubr.bf16.mxu0 %v667
        %1059 = vmatmul.mubr.bf16.gmra.mrb[0].mxu0 %v666
        %v1060 = vpop.f32.mrb[0].mxu0
        %v1061 = vadd.f32 %v549, %v1060
        %v1062 = vpop.f32.mrb[0].mxu0
        %v1063 = vadd.f32 %v549, %v1062
        %v1064 = vpop.f32.mrb[0].mxu0
        %v1065 = vadd.f32 %v554, %v1064
        %v1066 = vpop.f32.mrb[0].mxu0
        %v1067 = vadd.f32 %v554, %v1066
        %1068 = vmatprep.mubr.bf16.mxu0 %v669
        %1069 = vmatmul.mubr.bf16.gmra.mrb[0].mxu0 %v668
        %v1070 = vpop.f32.mrb[0].mxu0
        %v1071 = vadd.f32 %v559, %v1070
        %v1072 = vpop.f32.mrb[0].mxu0
        %v1073 = vadd.f32 %v559, %v1072
        %v1074 = vpop.f32.mrb[0].mxu0
        %v1075 = vadd.f32 %v564, %v1074
        %v1076 = vpop.f32.mrb[0].mxu0
        %v1077 = vadd.f32 %v564, %v1076
        %1078 = vmatprep.mubr.bf16.mxu0 %v671
        %1079 = vmatmul.mubr.bf16.gmra.mrb[0].mxu0 %v670
        %v1080 = vpop.f32.mrb[0].mxu0
        %v1081 = vadd.f32 %v569, %v1080
        %v1082 = vpop.f32.mrb[0].mxu0
        %v1083 = vadd.f32 %v569, %v1082
        %v1084 = vpop.f32.mrb[0].mxu0
        %v1085 = vadd.f32 %v574, %v1084
        %v1086 = vpop.f32.mrb[0].mxu0
        %v1087 = vadd.f32 %v574, %v1086
        %1088 = vmatprep.mubr.bf16.mxu0 %v673
        %1089 = vmatmul.mubr.bf16.gmra.mrb[0].mxu0 %v672
        %v1090 = vpop.f32.mrb[0].mxu0
        %v1091 = vadd.f32 %v579, %v1090
        %v1092 = vpop.f32.mrb[0].mxu0
        %v1093 = vadd.f32 %v579, %v1092
        %v1094 = vpop.f32.mrb[0].mxu0
        %v1095 = vadd.f32 %v584, %v1094
        %v1096 = vpop.f32.mrb[0].mxu0
        %v1097 = vadd.f32 %v584, %v1096
        %1098 = vmatprep.mubr.bf16.mxu0 %v675
        %1099 = vmatmul.mubr.bf16.gmra.mrb[0].mxu0 %v674
        %v1100 = vpop.f32.mrb[0].mxu0
        %v1101 = vadd.f32 %v589, %v1100
        %v1102 = vpop.f32.mrb[0].mxu0
        %v1103 = vadd.f32 %v589, %v1102
        %v1104 = vpop.f32.mrb[0].mxu0
        %v1105 = vadd.f32 %v594, %v1104
        %v1106 = vpop.f32.mrb[0].mxu0
        %v1107 = vadd.f32 %v594, %v1106
        %1108 = vmatprep.mubr.bf16.mxu0 %v677
        %1109 = vmatmul.mubr.bf16.gmra.mrb[0].mxu0 %v676
        %v1110 = vpop.f32.mrb[0].mxu0
        %v1111 = vadd.f32 %v599, %v1110
        %v1112 = vpop.f32.mrb[0].mxu0
        %v1113 = vadd.f32 %v599, %v1112
        %v1114 = vpop.f32.mrb[0].mxu0
        %v1115 = vadd.f32 %v604, %v1114
        %v1116 = vpop.f32.mrb[0].mxu0
        %v1117 = vadd.f32 %v604, %v1116
        %1118 = vmatprep.mubr.bf16.mxu0 %v679
        %1119 = vmatmul.mubr.bf16.gmra.mrb[0].mxu0 %v678
        %v1120 = vpop.f32.mrb[0].mxu0
        %v1121 = vadd.f32 %v609, %v1120
        %v1122 = vpop.f32.mrb[0].mxu0
        %v1123 = vadd.f32 %v609, %v1122
        %v1124 = vpop.f32.mrb[0].mxu0
        %v1125 = vadd.f32 %v614, %v1124
        %v1126 = vpop.f32.mrb[0].mxu0
        %v1127 = vadd.f32 %v614, %v1126
        %1128 = vdwg.mxu0
        %1129 = vmatprep.subr.bf16.mxu0 %v891
        %1130 = vmatpush1.bf16.msra.mxu0 %v890
        %1131 = vmatprep.subr.bf16.mxu0 %v895
        %1132 = vmatpush1.bf16.msra.mxu0 %v894
        %1133 = vmatprep.subr.bf16.mxu0 %v899
        %1134 = vmatpush1.bf16.msra.mxu0 %v898
        %1135 = vmatprep.subr.bf16.mxu0 %v903
        %1136 = vmatpush1.bf16.msra.mxu0 %v902
        %1137 = vmatprep.subr.bf16.mxu0 %v907
        %1138 = vmatpush1.bf16.msra.mxu0 %v906
        %1139 = vmatprep.subr.bf16.mxu0 %v911
        %1140 = vmatpush1.bf16.msra.mxu0 %v910
        %1141 = vmatprep.subr.bf16.mxu0 %v915
        %1142 = vmatpush1.bf16.msra.mxu0 %v914
        %1143 = vmatprep.subr.bf16.mxu0 %v919
        %1144 = vmatpush1.bf16.msra.mxu0 %v918
        %1145 = vmatprep.subr.bf16.mxu0 %v923
        %1146 = vmatpush1.bf16.msra.mxu0 %v922
        %1147 = vmatprep.subr.bf16.mxu0 %v927
        %1148 = vmatpush1.bf16.msra.mxu0 %v926
        %1149 = vmatprep.subr.bf16.mxu0 %v931
        %1150 = vmatpush1.bf16.msra.mxu0 %v930
        %1151 = vmatprep.subr.bf16.mxu0 %v935
        %1152 = vmatpush1.bf16.msra.mxu0 %v934
        %1153 = vmatprep.subr.bf16.mxu0 %v939
        %1154 = vmatpush1.bf16.msra.mxu0 %v938
        %1155 = vmatprep.subr.bf16.mxu0 %v943
        %1156 = vmatpush1.bf16.msra.mxu0 %v942
        %1157 = vmatprep.subr.bf16.mxu0 %v947
        %1158 = vmatpush1.bf16.msra.mxu0 %v946
        %1159 = vmatprep.subr.bf16.mxu0 %v951
        %1160 = vmatpush1.bf16.msra.mxu0 %v950
        %1161 = vmatprep.mubr.bf16.mxu0 %v665
        %1162 = vmatmul.mubr.bf16.gmra.mrb[0].mxu0 %v664
        %v1163 = vpop.f32.mrb[0].mxu0
        %v1164 = vadd.f32 %v539, %v1163
        %v1165 = vpop.f32.mrb[0].mxu0
        %v1166 = vadd.f32 %v539, %v1165
        %v1167 = vpop.f32.mrb[0].mxu0
        %v1168 = vadd.f32 %v544, %v1167
        %v1169 = vpop.f32.mrb[0].mxu0
        %v1170 = vadd.f32 %v544, %v1169
        %1171 = vmatprep.mubr.bf16.mxu0 %v667
        %1172 = vmatmul.mubr.bf16.gmra.mrb[0].mxu0 %v666
        %v1173 = vpop.f32.mrb[0].mxu0
        %v1174 = vadd.f32 %v549, %v1173
        %v1175 = vpop.f32.mrb[0].mxu0
        %v1176 = vadd.f32 %v549, %v1175
        %v1177 = vpop.f32.mrb[0].mxu0
        %v1178 = vadd.f32 %v554, %v1177
        %v1179 = vpop.f32.mrb[0].mxu0
        %v1180 = vadd.f32 %v554, %v1179
        %1181 = vmatprep.mubr.bf16.mxu0 %v669
        %1182 = vmatmul.mubr.bf16.gmra.mrb[0].mxu0 %v668
        %v1183 = vpop.f32.mrb[0].mxu0
        %v1184 = vadd.f32 %v559, %v1183
        %v1185 = vpop.f32.mrb[0].mxu0
        %v1186 = vadd.f32 %v559, %v1185
        %v1187 = vpop.f32.mrb[0].mxu0
        %v1188 = vadd.f32 %v564, %v1187
        %v1189 = vpop.f32.mrb[0].mxu0
        %v1190 = vadd.f32 %v564, %v1189
        %1191 = vmatprep.mubr.bf16.mxu0 %v671
        %1192 = vmatmul.mubr.bf16.gmra.mrb[0].mxu0 %v670
        %v1193 = vpop.f32.mrb[0].mxu0
        %v1194 = vadd.f32 %v569, %v1193
        %v1195 = vpop.f32.mrb[0].mxu0
        %v1196 = vadd.f32 %v569, %v1195
        %v1197 = vpop.f32.mrb[0].mxu0
        %v1198 = vadd.f32 %v574, %v1197
        %v1199 = vpop.f32.mrb[0].mxu0
        %v1200 = vadd.f32 %v574, %v1199
        %1201 = vmatprep.mubr.bf16.mxu0 %v673
        %1202 = vmatmul.mubr.bf16.gmra.mrb[0].mxu0 %v672
        %v1203 = vpop.f32.mrb[0].mxu0
        %v1204 = vadd.f32 %v579, %v1203
        %v1205 = vpop.f32.mrb[0].mxu0
        %v1206 = vadd.f32 %v579, %v1205
        %v1207 = vpop.f32.mrb[0].mxu0
        %v1208 = vadd.f32 %v584, %v1207
        %v1209 = vpop.f32.mrb[0].mxu0
        %v1210 = vadd.f32 %v584, %v1209
        %1211 = vmatprep.mubr.bf16.mxu0 %v675
        %1212 = vmatmul.mubr.bf16.gmra.mrb[0].mxu0 %v674
        %v1213 = vpop.f32.mrb[0].mxu0
        %v1214 = vadd.f32 %v589, %v1213
        %v1215 = vpop.f32.mrb[0].mxu0
        %v1216 = vadd.f32 %v589, %v1215
        %v1217 = vpop.f32.mrb[0].mxu0
        %v1218 = vadd.f32 %v594, %v1217
        %v1219 = vpop.f32.mrb[0].mxu0
        %v1220 = vadd.f32 %v594, %v1219
        %1221 = vmatprep.mubr.bf16.mxu0 %v677
        %1222 = vmatmul.mubr.bf16.gmra.mrb[0].mxu0 %v676
        %v1223 = vpop.f32.mrb[0].mxu0
        %v1224 = vadd.f32 %v599, %v1223
        %v1225 = vpop.f32.mrb[0].mxu0
        %v1226 = vadd.f32 %v599, %v1225
        %v1227 = vpop.f32.mrb[0].mxu0
        %v1228 = vadd.f32 %v604, %v1227
        %v1229 = vpop.f32.mrb[0].mxu0
        %v1230 = vadd.f32 %v604, %v1229
        %1231 = vmatprep.mubr.bf16.mxu0 %v679
        %1232 = vmatmul.mubr.bf16.gmra.mrb[0].mxu0 %v678
        %v1233 = vpop.f32.mrb[0].mxu0
        %v1234 = vadd.f32 %v609, %v1233
        %v1235 = vpop.f32.mrb[0].mxu0
        %v1236 = vadd.f32 %v609, %v1235
        %v1237 = vpop.f32.mrb[0].mxu0
        %v1238 = vadd.f32 %v614, %v1237
        %v1239 = vpop.f32.mrb[0].mxu0
        %v1240 = vadd.f32 %v614, %v1239
        %1241 = vdwg.mxu0
        %v1242 = vmax.f32 %v1051, 0.0
        %v1243 = vmax.f32 %v1053, 0.0
        %v1244 = vmax.f32 %v1164, 0.0
        %v1245 = vmax.f32 %v1166, 0.0
        %v1246 = vmax.f32 %v1055, 0.0
        %v1247 = vmax.f32 %v1057, 0.0
        %v1248 = vmax.f32 %v1168, 0.0
        %v1249 = vmax.f32 %v1170, 0.0
        %v1250 = vmax.f32 %v1061, 0.0
        %v1251 = vmax.f32 %v1063, 0.0
        %v1252 = vmax.f32 %v1174, 0.0
        %v1253 = vmax.f32 %v1176, 0.0
        %v1254 = vmax.f32 %v1065, 0.0
        %v1255 = vmax.f32 %v1067, 0.0
        %v1256 = vmax.f32 %v1178, 0.0
        %v1257 = vmax.f32 %v1180, 0.0
        %v1258 = vmax.f32 %v1071, 0.0
        %v1259 = vmax.f32 %v1073, 0.0
        %v1260 = vmax.f32 %v1184, 0.0
        %v1261 = vmax.f32 %v1186, 0.0
        %v1262 = vmax.f32 %v1075, 0.0
        %v1263 = vmax.f32 %v1077, 0.0
        %v1264 = vmax.f32 %v1188, 0.0
        %v1265 = vmax.f32 %v1190, 0.0
        %v1266 = vmax.f32 %v1081, 0.0
        %v1267 = vmax.f32 %v1083, 0.0
        %v1268 = vmax.f32 %v1194, 0.0
        %v1269 = vmax.f32 %v1196, 0.0
        %v1270 = vmax.f32 %v1085, 0.0
        %v1271 = vmax.f32 %v1087, 0.0
        %v1272 = vmax.f32 %v1198, 0.0
        %v1273 = vmax.f32 %v1200, 0.0
        %v1274 = vmax.f32 %v1091, 0.0
        %v1275 = vmax.f32 %v1093, 0.0
        %v1276 = vmax.f32 %v1204, 0.0
        %v1277 = vmax.f32 %v1206, 0.0
        %v1278 = vmax.f32 %v1095, 0.0
        %v1279 = vmax.f32 %v1097, 0.0
        %v1280 = vmax.f32 %v1208, 0.0
        %v1281 = vmax.f32 %v1210, 0.0
        %v1282 = vmax.f32 %v1101, 0.0
        %v1283 = vmax.f32 %v1103, 0.0
        %v1284 = vmax.f32 %v1214, 0.0
        %v1285 = vmax.f32 %v1216, 0.0
        %v1286 = vmax.f32 %v1105, 0.0
        %v1287 = vmax.f32 %v1107, 0.0
        %v1288 = vmax.f32 %v1218, 0.0
        %v1289 = vmax.f32 %v1220, 0.0
        %v1290 = vmax.f32 %v1111, 0.0
        %v1291 = vmax.f32 %v1113, 0.0
        %v1292 = vmax.f32 %v1224, 0.0
        %v1293 = vmax.f32 %v1226, 0.0
        %v1294 = vmax.f32 %v1115, 0.0
        %v1295 = vmax.f32 %v1117, 0.0
        %v1296 = vmax.f32 %v1228, 0.0
        %v1297 = vmax.f32 %v1230, 0.0
        %v1298 = vmax.f32 %v1121, 0.0
        %v1299 = vmax.f32 %v1123, 0.0
        %v1300 = vmax.f32 %v1234, 0.0
        %v1301 = vmax.f32 %v1236, 0.0
        %v1302 = vmax.f32 %v1125, 0.0
        %v1303 = vmax.f32 %v1127, 0.0
        %v1304 = vmax.f32 %v1238, 0.0
        %v1305 = vmax.f32 %v1240, 0.0
        %v1306 = vpack.c.bf16 %v1246, %v1242
        %v1307 = vpack.c.bf16 %v1247, %v1243
        %v1308 = vpack.c.bf16 %v1248, %v1244
        %v1309 = vpack.c.bf16 %v1249, %v1245
        %v1310 = vpack.c.bf16 %v1254, %v1250
        %v1311 = vpack.c.bf16 %v1255, %v1251
        %v1312 = vpack.c.bf16 %v1256, %v1252
        %v1313 = vpack.c.bf16 %v1257, %v1253
        %v1314 = vpack.c.bf16 %v1262, %v1258
        %v1315 = vpack.c.bf16 %v1263, %v1259
        %v1316 = vpack.c.bf16 %v1264, %v1260
        %v1317 = vpack.c.bf16 %v1265, %v1261
        %v1318 = vpack.c.bf16 %v1270, %v1266
        %v1319 = vpack.c.bf16 %v1271, %v1267
        %v1320 = vpack.c.bf16 %v1272, %v1268
        %v1321 = vpack.c.bf16 %v1273, %v1269
        %v1322 = vpack.c.bf16 %v1278, %v1274
        %v1323 = vpack.c.bf16 %v1279, %v1275
        %v1324 = vpack.c.bf16 %v1280, %v1276
        %v1325 = vpack.c.bf16 %v1281, %v1277
        %v1326 = vpack.c.bf16 %v1286, %v1282
        %v1327 = vpack.c.bf16 %v1287, %v1283
        %v1328 = vpack.c.bf16 %v1288, %v1284
        %v1329 = vpack.c.bf16 %v1289, %v1285
        %v1330 = vpack.c.bf16 %v1294, %v1290
        %v1331 = vpack.c.bf16 %v1295, %v1291
        %v1332 = vpack.c.bf16 %v1296, %v1292
        %v1333 = vpack.c.bf16 %v1297, %v1293
        %v1334 = vpack.c.bf16 %v1302, %v1298
        %v1335 = vpack.c.bf16 %v1303, %v1299
        %v1336 = vpack.c.bf16 %v1304, %v1300
        %v1337 = vpack.c.bf16 %v1305, %v1301
        %v1338 = vld [vmem:[%s3] sm:$0xf]
        %v1339 = vld [vmem:[%s3 + $0x4] sm:$0xf]
        %v1340 = vld [vmem:[%s3 + $0x8] sm:$0xf]
        %v1341 = vld [vmem:[%s3 + $0xc] sm:$0xf]
        %v1342 = vld [vmem:[%s3 + $0x10] sm:$0xf]
        %v1343 = vld [vmem:[%s3 + $0x14] sm:$0xf]
        %v1344 = vld [vmem:[%s3 + $0x18] sm:$0xf]
        %v1345 = vld [vmem:[%s3 + $0x1c] sm:$0xf]
        %v1346 = vld [vmem:[%s3 + $0x20] sm:$0xf]
        %v1347 = vld [vmem:[%s3 + $0x24] sm:$0xf]
        %v1348 = vld [vmem:[%s3 + $0x28] sm:$0xf]
        %v1349 = vld [vmem:[%s3 + $0x2c] sm:$0xf]
        %v1350 = vld [vmem:[%s3 + $0x30] sm:$0xf]
        %v1351 = vld [vmem:[%s3 + $0x34] sm:$0xf]
        %v1352 = vld [vmem:[%s3 + $0x38] sm:$0xf]
        %v1353 = vld [vmem:[%s3 + $0x3c] sm:$0xf]
        %v1354 = vld [vmem:[%s4] sm:$0xff]
        %v1355 = vld [vmem:[%s4 + $0x8] sm:$0xff]
        %v1356 = vld [vmem:[%s4 + $0x10] sm:$0xff]
        %v1357 = vld [vmem:[%s4 + $0x18] sm:$0xff]
        %v1358 = vld [vmem:[%s4 + $0x20] sm:$0xff]
        %v1359 = vld [vmem:[%s4 + $0x28] sm:$0xff]
        %v1360 = vld [vmem:[%s4 + $0x30] sm:$0xff]
        %v1361 = vld [vmem:[%s4 + $0x38] sm:$0xff]
        %v1362 = vld [vmem:[%s4 + $0x40] sm:$0xff]
        %v1363 = vld [vmem:[%s4 + $0x48] sm:$0xff]
        %v1364 = vld [vmem:[%s4 + $0x50] sm:$0xff]
        %v1365 = vld [vmem:[%s4 + $0x58] sm:$0xff]
        %v1366 = vld [vmem:[%s4 + $0x60] sm:$0xff]
        %v1367 = vld [vmem:[%s4 + $0x68] sm:$0xff]
        %v1368 = vld [vmem:[%s4 + $0x70] sm:$0xff]
        %v1369 = vld [vmem:[%s4 + $0x78] sm:$0xff]
        %1371 = vset.pattern.permute.xlu0 0
        %1372 = vperm.xlu0 %1371, %v1354
        %v1373 = vpop.permute.xlu0 %1372
        %1376 = vset.pattern.permute.xlu0 0
        %1377 = vperm.xlu0 %1376, %v1355
        %v1378 = vpop.permute.xlu0 %1377
        %1381 = vset.pattern.permute.xlu0 0
        %1382 = vperm.xlu0 %1381, %v1356
        %v1383 = vpop.permute.xlu0 %1382
        %1386 = vset.pattern.permute.xlu0 0
        %1387 = vperm.xlu0 %1386, %v1357
        %v1388 = vpop.permute.xlu0 %1387
        %1391 = vset.pattern.permute.xlu0 0
        %1392 = vperm.xlu0 %1391, %v1358
        %v1393 = vpop.permute.xlu0 %1392
        %1396 = vset.pattern.permute.xlu0 0
        %1397 = vperm.xlu0 %1396, %v1359
        %v1398 = vpop.permute.xlu0 %1397
        %1401 = vset.pattern.permute.xlu0 0
        %1402 = vperm.xlu0 %1401, %v1360
        %v1403 = vpop.permute.xlu0 %1402
        %1406 = vset.pattern.permute.xlu0 0
        %1407 = vperm.xlu0 %1406, %v1361
        %v1408 = vpop.permute.xlu0 %1407
        %1411 = vset.pattern.permute.xlu0 0
        %1412 = vperm.xlu0 %1411, %v1362
        %v1413 = vpop.permute.xlu0 %1412
        %1416 = vset.pattern.permute.xlu0 0
        %1417 = vperm.xlu0 %1416, %v1363
        %v1418 = vpop.permute.xlu0 %1417
        %1421 = vset.pattern.permute.xlu0 0
        %1422 = vperm.xlu0 %1421, %v1364
        %v1423 = vpop.permute.xlu0 %1422
        %1426 = vset.pattern.permute.xlu0 0
        %1427 = vperm.xlu0 %1426, %v1365
        %v1428 = vpop.permute.xlu0 %1427
        %1431 = vset.pattern.permute.xlu0 0
        %1432 = vperm.xlu0 %1431, %v1366
        %v1433 = vpop.permute.xlu0 %1432
        %1436 = vset.pattern.permute.xlu0 0
        %1437 = vperm.xlu0 %1436, %v1367
        %v1438 = vpop.permute.xlu0 %1437
        %1441 = vset.pattern.permute.xlu0 0
        %1442 = vperm.xlu0 %1441, %v1368
        %v1443 = vpop.permute.xlu0 %1442
        %1446 = vset.pattern.permute.xlu0 0
        %1447 = vperm.xlu0 %1446, %v1369
        %v1448 = vpop.permute.xlu0 %1447
        %v1466 = vunpack.c.l.b16 %v1338
        %v1467 = vunpack.c.l.b16 %v1339
        %v1468 = vunpack.c.l.b16 %v1340
        %v1469 = vunpack.c.l.b16 %v1341
        %v1470 = vunpack.c.l.b16 %v1342
        %v1471 = vunpack.c.l.b16 %v1343
        %v1472 = vunpack.c.l.b16 %v1344
        %v1473 = vunpack.c.l.b16 %v1345
        %v1474 = vunpack.c.l.b16 %v1346
        %v1475 = vunpack.c.l.b16 %v1347
        %v1476 = vunpack.c.l.b16 %v1348
        %v1477 = vunpack.c.l.b16 %v1349
        %v1478 = vunpack.c.l.b16 %v1350
        %v1479 = vunpack.c.l.b16 %v1351
        %v1480 = vunpack.c.l.b16 %v1352
        %v1481 = vunpack.c.l.b16 %v1353
        %v1482 = vpack.c.b16 %v1467, %v1466
        %v1483 = vpack.c.b16 %v1469, %v1468
        %v1484 = vpack.c.b16 %v1471, %v1470
        %v1485 = vpack.c.b16 %v1473, %v1472
        %v1486 = vpack.c.b16 %v1475, %v1474
        %v1487 = vpack.c.b16 %v1477, %v1476
        %v1488 = vpack.c.b16 %v1479, %v1478
        %v1489 = vpack.c.b16 %v1481, %v1480
        %1498 = vmatprep.subr.bf16.mxu0 %v1307
        %1499 = vmatpush1.bf16.msra.mxu0 %v1306
        %1500 = vmatprep.subr.bf16.mxu0 %v1311
        %1501 = vmatpush1.bf16.msra.mxu0 %v1310
        %1502 = vmatprep.subr.bf16.mxu0 %v1315
        %1503 = vmatpush1.bf16.msra.mxu0 %v1314
        %1504 = vmatprep.subr.bf16.mxu0 %v1319
        %1505 = vmatpush1.bf16.msra.mxu0 %v1318
        %1506 = vmatprep.subr.bf16.mxu0 %v1323
        %1507 = vmatpush1.bf16.msra.mxu0 %v1322
        %1508 = vmatprep.subr.bf16.mxu0 %v1327
        %1509 = vmatpush1.bf16.msra.mxu0 %v1326
        %1510 = vmatprep.subr.bf16.mxu0 %v1331
        %1511 = vmatpush1.bf16.msra.mxu0 %v1330
        %1512 = vmatprep.subr.bf16.mxu0 %v1335
        %1513 = vmatpush1.bf16.msra.mxu0 %v1334
        %1514 = vmatprep.subr.bf16.mxu0 0
        %1515 = vmatpush1.bf16.msra.mxu0 0
        %1516 = vmatprep.subr.bf16.mxu0 0
        %1517 = vmatpush1.bf16.msra.mxu0 0
        %1518 = vmatprep.subr.bf16.mxu0 0
        %1519 = vmatpush1.bf16.msra.mxu0 0
        %1520 = vmatprep.subr.bf16.mxu0 0
        %1521 = vmatpush1.bf16.msra.mxu0 0
        %1522 = vmatprep.subr.bf16.mxu0 0
        %1523 = vmatpush1.bf16.msra.mxu0 0
        %1524 = vmatprep.subr.bf16.mxu0 0
        %1525 = vmatpush1.bf16.msra.mxu0 0
        %1526 = vmatprep.subr.bf16.mxu0 0
        %1527 = vmatpush1.bf16.msra.mxu0 0
        %1528 = vmatprep.subr.bf16.mxu0 0
        %1529 = vmatpush1.bf16.msra.mxu0 0
        %1530 = vmatprep.mubr.bf16.mxu0 0
        %1531 = vmatmul.mubr.bf16.gmra.mrb[0].mxu0 %v1482
        %v1532 = vpop.f32.mrb[0].mxu0
        %v1533 = vadd.f32 %v1373, %v1532
        %v1534 = vpop.f32.mrb[0].mxu0
        %v1535 = vadd.f32 %v1373, %v1534
        %v1536 = vpop.f32.mrb[0].mxu0
        %v1537 = vadd.f32 %v1378, %v1536
        %v1538 = vpop.f32.mrb[0].mxu0
        %v1539 = vadd.f32 %v1378, %v1538
        %1540 = vmatprep.mubr.bf16.mxu0 0
        %1541 = vmatmul.mubr.bf16.gmra.mrb[0].mxu0 %v1483
        %v1542 = vpop.f32.mrb[0].mxu0
        %v1543 = vadd.f32 %v1383, %v1542
        %v1544 = vpop.f32.mrb[0].mxu0
        %v1545 = vadd.f32 %v1383, %v1544
        %v1546 = vpop.f32.mrb[0].mxu0
        %v1547 = vadd.f32 %v1388, %v1546
        %v1548 = vpop.f32.mrb[0].mxu0
        %v1549 = vadd.f32 %v1388, %v1548
        %1550 = vmatprep.mubr.bf16.mxu0 0
        %1551 = vmatmul.mubr.bf16.gmra.mrb[0].mxu0 %v1484
        %v1552 = vpop.f32.mrb[0].mxu0
        %v1553 = vadd.f32 %v1393, %v1552
        %v1554 = vpop.f32.mrb[0].mxu0
        %v1555 = vadd.f32 %v1393, %v1554
        %v1556 = vpop.f32.mrb[0].mxu0
        %v1557 = vadd.f32 %v1398, %v1556
        %v1558 = vpop.f32.mrb[0].mxu0
        %v1559 = vadd.f32 %v1398, %v1558
        %1560 = vmatprep.mubr.bf16.mxu0 0
        %1561 = vmatmul.mubr.bf16.gmra.mrb[0].mxu0 %v1485
        %v1562 = vpop.f32.mrb[0].mxu0
        %v1563 = vadd.f32 %v1403, %v1562
        %v1564 = vpop.f32.mrb[0].mxu0
        %v1565 = vadd.f32 %v1403, %v1564
        %v1566 = vpop.f32.mrb[0].mxu0
        %v1567 = vadd.f32 %v1408, %v1566
        %v1568 = vpop.f32.mrb[0].mxu0
        %v1569 = vadd.f32 %v1408, %v1568
        %1570 = vmatprep.mubr.bf16.mxu0 0
        %1571 = vmatmul.mubr.bf16.gmra.mrb[0].mxu0 %v1486
        %v1572 = vpop.f32.mrb[0].mxu0
        %v1573 = vadd.f32 %v1413, %v1572
        %v1574 = vpop.f32.mrb[0].mxu0
        %v1575 = vadd.f32 %v1413, %v1574
        %v1576 = vpop.f32.mrb[0].mxu0
        %v1577 = vadd.f32 %v1418, %v1576
        %v1578 = vpop.f32.mrb[0].mxu0
        %v1579 = vadd.f32 %v1418, %v1578
        %1580 = vmatprep.mubr.bf16.mxu0 0
        %1581 = vmatmul.mubr.bf16.gmra.mrb[0].mxu0 %v1487
        %v1582 = vpop.f32.mrb[0].mxu0
        %v1583 = vadd.f32 %v1423, %v1582
        %v1584 = vpop.f32.mrb[0].mxu0
        %v1585 = vadd.f32 %v1423, %v1584
        %v1586 = vpop.f32.mrb[0].mxu0
        %v1587 = vadd.f32 %v1428, %v1586
        %v1588 = vpop.f32.mrb[0].mxu0
        %v1589 = vadd.f32 %v1428, %v1588
        %1590 = vmatprep.mubr.bf16.mxu0 0
        %1591 = vmatmul.mubr.bf16.gmra.mrb[0].mxu0 %v1488
        %v1592 = vpop.f32.mrb[0].mxu0
        %v1593 = vadd.f32 %v1433, %v1592
        %v1594 = vpop.f32.mrb[0].mxu0
        %v1595 = vadd.f32 %v1433, %v1594
        %v1596 = vpop.f32.mrb[0].mxu0
        %v1597 = vadd.f32 %v1438, %v1596
        %v1598 = vpop.f32.mrb[0].mxu0
        %v1599 = vadd.f32 %v1438, %v1598
        %1600 = vmatprep.mubr.bf16.mxu0 0
        %1601 = vmatmul.mubr.bf16.gmra.mrb[0].mxu0 %v1489
        %v1602 = vpop.f32.mrb[0].mxu0
        %v1603 = vadd.f32 %v1443, %v1602
        %v1604 = vpop.f32.mrb[0].mxu0
        %v1605 = vadd.f32 %v1443, %v1604
        %v1606 = vpop.f32.mrb[0].mxu0
        %v1607 = vadd.f32 %v1448, %v1606
        %v1608 = vpop.f32.mrb[0].mxu0
        %v1609 = vadd.f32 %v1448, %v1608
        %1610 = vdwg.mxu0
        %1611 = vmatprep.subr.bf16.mxu0 %v1309
        %1612 = vmatpush1.bf16.msra.mxu0 %v1308
        %1613 = vmatprep.subr.bf16.mxu0 %v1313
        %1614 = vmatpush1.bf16.msra.mxu0 %v1312
        %1615 = vmatprep.subr.bf16.mxu0 %v1317
        %1616 = vmatpush1.bf16.msra.mxu0 %v1316
        %1617 = vmatprep.subr.bf16.mxu0 %v1321
        %1618 = vmatpush1.bf16.msra.mxu0 %v1320
        %1619 = vmatprep.subr.bf16.mxu0 %v1325
        %1620 = vmatpush1.bf16.msra.mxu0 %v1324
        %1621 = vmatprep.subr.bf16.mxu0 %v1329
        %1622 = vmatpush1.bf16.msra.mxu0 %v1328
        %1623 = vmatprep.subr.bf16.mxu0 %v1333
        %1624 = vmatpush1.bf16.msra.mxu0 %v1332
        %1625 = vmatprep.subr.bf16.mxu0 %v1337
        %1626 = vmatpush1.bf16.msra.mxu0 %v1336
        %1627 = vmatprep.subr.bf16.mxu0 0
        %1628 = vmatpush1.bf16.msra.mxu0 0
        %1629 = vmatprep.subr.bf16.mxu0 0
        %1630 = vmatpush1.bf16.msra.mxu0 0
        %1631 = vmatprep.subr.bf16.mxu0 0
        %1632 = vmatpush1.bf16.msra.mxu0 0
        %1633 = vmatprep.subr.bf16.mxu0 0
        %1634 = vmatpush1.bf16.msra.mxu0 0
        %1635 = vmatprep.subr.bf16.mxu0 0
        %1636 = vmatpush1.bf16.msra.mxu0 0
        %1637 = vmatprep.subr.bf16.mxu0 0
        %1638 = vmatpush1.bf16.msra.mxu0 0
        %1639 = vmatprep.subr.bf16.mxu0 0
        %1640 = vmatpush1.bf16.msra.mxu0 0
        %1641 = vmatprep.subr.bf16.mxu0 0
        %1642 = vmatpush1.bf16.msra.mxu0 0
        %1643 = vmatprep.mubr.bf16.mxu0 0
        %1644 = vmatmul.mubr.bf16.gmra.mrb[0].mxu0 %v1482
        %v1645 = vpop.f32.mrb[0].mxu0
        %v1646 = vadd.f32 %v1373, %v1645
        %v1647 = vpop.f32.mrb[0].mxu0
        %v1648 = vadd.f32 %v1373, %v1647
        %v1649 = vpop.f32.mrb[0].mxu0
        %v1650 = vadd.f32 %v1378, %v1649
        %v1651 = vpop.f32.mrb[0].mxu0
        %v1652 = vadd.f32 %v1378, %v1651
        %1653 = vmatprep.mubr.bf16.mxu0 0
        %1654 = vmatmul.mubr.bf16.gmra.mrb[0].mxu0 %v1483
        %v1655 = vpop.f32.mrb[0].mxu0
        %v1656 = vadd.f32 %v1383, %v1655
        %v1657 = vpop.f32.mrb[0].mxu0
        %v1658 = vadd.f32 %v1383, %v1657
        %v1659 = vpop.f32.mrb[0].mxu0
        %v1660 = vadd.f32 %v1388, %v1659
        %v1661 = vpop.f32.mrb[0].mxu0
        %v1662 = vadd.f32 %v1388, %v1661
        %1663 = vmatprep.mubr.bf16.mxu0 0
        %1664 = vmatmul.mubr.bf16.gmra.mrb[0].mxu0 %v1484
        %v1665 = vpop.f32.mrb[0].mxu0
        %v1666 = vadd.f32 %v1393, %v1665
        %v1667 = vpop.f32.mrb[0].mxu0
        %v1668 = vadd.f32 %v1393, %v1667
        %v1669 = vpop.f32.mrb[0].mxu0
        %v1670 = vadd.f32 %v1398, %v1669
        %v1671 = vpop.f32.mrb[0].mxu0
        %v1672 = vadd.f32 %v1398, %v1671
        %1673 = vmatprep.mubr.bf16.mxu0 0
        %1674 = vmatmul.mubr.bf16.gmra.mrb[0].mxu0 %v1485
        %v1675 = vpop.f32.mrb[0].mxu0
        %v1676 = vadd.f32 %v1403, %v1675
        %v1677 = vpop.f32.mrb[0].mxu0
        %v1678 = vadd.f32 %v1403, %v1677
        %v1679 = vpop.f32.mrb[0].mxu0
        %v1680 = vadd.f32 %v1408, %v1679
        %v1681 = vpop.f32.mrb[0].mxu0
        %v1682 = vadd.f32 %v1408, %v1681
        %1683 = vmatprep.mubr.bf16.mxu0 0
        %1684 = vmatmul.mubr.bf16.gmra.mrb[0].mxu0 %v1486
        %v1685 = vpop.f32.mrb[0].mxu0
        %v1686 = vadd.f32 %v1413, %v1685
        %v1687 = vpop.f32.mrb[0].mxu0
        %v1688 = vadd.f32 %v1413, %v1687
        %v1689 = vpop.f32.mrb[0].mxu0
        %v1690 = vadd.f32 %v1418, %v1689
        %v1691 = vpop.f32.mrb[0].mxu0
        %v1692 = vadd.f32 %v1418, %v1691
        %1693 = vmatprep.mubr.bf16.mxu0 0
        %1694 = vmatmul.mubr.bf16.gmra.mrb[0].mxu0 %v1487
        %v1695 = vpop.f32.mrb[0].mxu0
        %v1696 = vadd.f32 %v1423, %v1695
        %v1697 = vpop.f32.mrb[0].mxu0
        %v1698 = vadd.f32 %v1423, %v1697
        %v1699 = vpop.f32.mrb[0].mxu0
        %v1700 = vadd.f32 %v1428, %v1699
        %v1701 = vpop.f32.mrb[0].mxu0
        %v1702 = vadd.f32 %v1428, %v1701
        %1703 = vmatprep.mubr.bf16.mxu0 0
        %1704 = vmatmul.mubr.bf16.gmra.mrb[0].mxu0 %v1488
        %v1705 = vpop.f32.mrb[0].mxu0
        %v1706 = vadd.f32 %v1433, %v1705
        %v1707 = vpop.f32.mrb[0].mxu0
        %v1708 = vadd.f32 %v1433, %v1707
        %v1709 = vpop.f32.mrb[0].mxu0
        %v1710 = vadd.f32 %v1438, %v1709
        %v1711 = vpop.f32.mrb[0].mxu0
        %v1712 = vadd.f32 %v1438, %v1711
        %1713 = vmatprep.mubr.bf16.mxu0 0
        %1714 = vmatmul.mubr.bf16.gmra.mrb[0].mxu0 %v1489
        %v1715 = vpop.f32.mrb[0].mxu0
        %v1716 = vadd.f32 %v1443, %v1715
        %v1717 = vpop.f32.mrb[0].mxu0
        %v1718 = vadd.f32 %v1443, %v1717
        %v1719 = vpop.f32.mrb[0].mxu0
        %v1720 = vadd.f32 %v1448, %v1719
        %v1721 = vpop.f32.mrb[0].mxu0
        %v1722 = vadd.f32 %v1448, %v1721
        %1723 = vdwg.mxu0
        %v1724 = vmax.f32 %v1533, 0.0
        %v1725 = vmax.f32 %v1535, 0.0
        %v1726 = vmax.f32 %v1646, 0.0
        %v1727 = vmax.f32 %v1648, 0.0
        %v1728 = vmax.f32 %v1537, 0.0
        %v1729 = vmax.f32 %v1539, 0.0
        %v1730 = vmax.f32 %v1650, 0.0
        %v1731 = vmax.f32 %v1652, 0.0
        %v1732 = vmax.f32 %v1543, 0.0
        %v1733 = vmax.f32 %v1545, 0.0
        %v1734 = vmax.f32 %v1656, 0.0
        %v1735 = vmax.f32 %v1658, 0.0
        %v1736 = vmax.f32 %v1547, 0.0
        %v1737 = vmax.f32 %v1549, 0.0
        %v1738 = vmax.f32 %v1660, 0.0
        %v1739 = vmax.f32 %v1662, 0.0
        %v1740 = vmax.f32 %v1553, 0.0
        %v1741 = vmax.f32 %v1555, 0.0
        %v1742 = vmax.f32 %v1666, 0.0
        %v1743 = vmax.f32 %v1668, 0.0
        %v1744 = vmax.f32 %v1557, 0.0
        %v1745 = vmax.f32 %v1559, 0.0
        %v1746 = vmax.f32 %v1670, 0.0
        %v1747 = vmax.f32 %v1672, 0.0
        %v1748 = vmax.f32 %v1563, 0.0
        %v1749 = vmax.f32 %v1565, 0.0
        %v1750 = vmax.f32 %v1676, 0.0
        %v1751 = vmax.f32 %v1678, 0.0
        %v1752 = vmax.f32 %v1567, 0.0
        %v1753 = vmax.f32 %v1569, 0.0
        %v1754 = vmax.f32 %v1680, 0.0
        %v1755 = vmax.f32 %v1682, 0.0
        %v1756 = vmax.f32 %v1573, 0.0
        %v1757 = vmax.f32 %v1575, 0.0
        %v1758 = vmax.f32 %v1686, 0.0
        %v1759 = vmax.f32 %v1688, 0.0
        %v1760 = vmax.f32 %v1577, 0.0
        %v1761 = vmax.f32 %v1579, 0.0
        %v1762 = vmax.f32 %v1690, 0.0
        %v1763 = vmax.f32 %v1692, 0.0
        %v1764 = vmax.f32 %v1583, 0.0
        %v1765 = vmax.f32 %v1585, 0.0
        %v1766 = vmax.f32 %v1696, 0.0
        %v1767 = vmax.f32 %v1698, 0.0
        %v1768 = vmax.f32 %v1587, 0.0
        %v1769 = vmax.f32 %v1589, 0.0
        %v1770 = vmax.f32 %v1700, 0.0
        %v1771 = vmax.f32 %v1702, 0.0
        %v1772 = vmax.f32 %v1593, 0.0
        %v1773 = vmax.f32 %v1595, 0.0
        %v1774 = vmax.f32 %v1706, 0.0
        %v1775 = vmax.f32 %v1708, 0.0
        %v1776 = vmax.f32 %v1597, 0.0
        %v1777 = vmax.f32 %v1599, 0.0
        %v1778 = vmax.f32 %v1710, 0.0
        %v1779 = vmax.f32 %v1712, 0.0
        %v1780 = vmax.f32 %v1603, 0.0
        %v1781 = vmax.f32 %v1605, 0.0
        %v1782 = vmax.f32 %v1716, 0.0
        %v1783 = vmax.f32 %v1718, 0.0
        %v1784 = vmax.f32 %v1607, 0.0
        %v1785 = vmax.f32 %v1609, 0.0
        %v1786 = vmax.f32 %v1720, 0.0
        %v1787 = vmax.f32 %v1722, 0.0
        %v1788 = vpack.c.bf16 %v1728, %v1724
        %v1789 = vpack.c.bf16 %v1729, %v1725
        %v1790 = vpack.c.bf16 %v1730, %v1726
        %v1791 = vpack.c.bf16 %v1731, %v1727
        %v1792 = vpack.c.bf16 %v1736, %v1732
        %v1793 = vpack.c.bf16 %v1737, %v1733
        %v1794 = vpack.c.bf16 %v1738, %v1734
        %v1795 = vpack.c.bf16 %v1739, %v1735
        %v1796 = vpack.c.bf16 %v1744, %v1740
        %v1797 = vpack.c.bf16 %v1745, %v1741
        %v1798 = vpack.c.bf16 %v1746, %v1742
        %v1799 = vpack.c.bf16 %v1747, %v1743
        %v1800 = vpack.c.bf16 %v1752, %v1748
        %v1801 = vpack.c.bf16 %v1753, %v1749
        %v1802 = vpack.c.bf16 %v1754, %v1750
        %v1803 = vpack.c.bf16 %v1755, %v1751
        %v1804 = vpack.c.bf16 %v1760, %v1756
        %v1805 = vpack.c.bf16 %v1761, %v1757
        %v1806 = vpack.c.bf16 %v1762, %v1758
        %v1807 = vpack.c.bf16 %v1763, %v1759
        %v1808 = vpack.c.bf16 %v1768, %v1764
        %v1809 = vpack.c.bf16 %v1769, %v1765
        %v1810 = vpack.c.bf16 %v1770, %v1766
        %v1811 = vpack.c.bf16 %v1771, %v1767
        %v1812 = vpack.c.bf16 %v1776, %v1772
        %v1813 = vpack.c.bf16 %v1777, %v1773
        %v1814 = vpack.c.bf16 %v1778, %v1774
        %v1815 = vpack.c.bf16 %v1779, %v1775
        %v1816 = vpack.c.bf16 %v1784, %v1780
        %v1817 = vpack.c.bf16 %v1785, %v1781
        %v1818 = vpack.c.bf16 %v1786, %v1782
        %v1819 = vpack.c.bf16 %v1787, %v1783
        %v1820 = vld [vmem:[%s5] sm:$0xf]
        %v1821 = vld [vmem:[%s5 + $0x4] sm:$0xf]
        %v1822 = vld [vmem:[%s5 + $0x8] sm:$0xf]
        %v1823 = vld [vmem:[%s5 + $0xc] sm:$0xf]
        %v1824 = vld [vmem:[%s5 + $0x10] sm:$0x3]
        %v1825 = vld [vmem:[%s6] sm:$0xff]
        %v1826 = vld [vmem:[%s6 + $0x8] sm:$0xff]
        %v1827 = vld [vmem:[%s6 + $0x10] sm:$0xff]
        %v1828 = vld [vmem:[%s6 + $0x18] sm:$0xff]
        %v1829 = vld [vmem:[%s6 + $0x20] sm:$0xf]
        %1831 = vset.pattern.permute.xlu0 0
        %1832 = vperm.xlu0 %1831, %v1825
        %v1833 = vpop.permute.xlu0 %1832
        %1836 = vset.pattern.permute.xlu0 0
        %1837 = vperm.xlu0 %1836, %v1826
        %v1838 = vpop.permute.xlu0 %1837
        %1841 = vset.pattern.permute.xlu0 0
        %1842 = vperm.xlu0 %1841, %v1827
        %v1843 = vpop.permute.xlu0 %1842
        %1846 = vset.pattern.permute.xlu0 0
        %1847 = vperm.xlu0 %1846, %v1828
        %v1848 = vpop.permute.xlu0 %1847
        %1851 = vset.pattern.permute.xlu0 0
        %1852 = vperm.xlu0 %1851, %v1829
        %v1853 = vpop.permute.xlu0 %1852
        %v1860 = vunpack.c.l.b16 %v1820
        %v1861 = vunpack.c.l.b16 %v1821
        %v1862 = vunpack.c.l.b16 %v1822
        %v1863 = vunpack.c.l.b16 %v1823
        %v1864 = vunpack.c.l.b16 %v1824
        %v1865 = vpack.c.b16 %v1861, %v1860
        %v1866 = vpack.c.b16 %v1863, %v1862
        %v1867 = vpack.c.b16 %v1864, %v1864
        %1871 = vmatprep.subr.bf16.mxu0 %v1789
        %1872 = vmatpush1.bf16.msra.mxu0 %v1788
        %1873 = vmatprep.subr.bf16.mxu0 %v1793
        %1874 = vmatpush1.bf16.msra.mxu0 %v1792
        %1875 = vmatprep.subr.bf16.mxu0 %v1797
        %1876 = vmatpush1.bf16.msra.mxu0 %v1796
        %1877 = vmatprep.subr.bf16.mxu0 %v1801
        %1878 = vmatpush1.bf16.msra.mxu0 %v1800
        %1879 = vmatprep.subr.bf16.mxu0 %v1805
        %1880 = vmatpush1.bf16.msra.mxu0 %v1804
        %1881 = vmatprep.subr.bf16.mxu0 %v1809
        %1882 = vmatpush1.bf16.msra.mxu0 %v1808
        %1883 = vmatprep.subr.bf16.mxu0 %v1813
        %1884 = vmatpush1.bf16.msra.mxu0 %v1812
        %1885 = vmatprep.subr.bf16.mxu0 %v1817
        %1886 = vmatpush1.bf16.msra.mxu0 %v1816
        %1887 = vmatprep.subr.bf16.mxu0 0
        %1888 = vmatpush1.bf16.msra.mxu0 0
        %1889 = vmatprep.subr.bf16.mxu0 0
        %1890 = vmatpush1.bf16.msra.mxu0 0
        %1891 = vmatprep.subr.bf16.mxu0 0
        %1892 = vmatpush1.bf16.msra.mxu0 0
        %1893 = vmatprep.subr.bf16.mxu0 0
        %1894 = vmatpush1.bf16.msra.mxu0 0
        %1895 = vmatprep.subr.bf16.mxu0 0
        %1896 = vmatpush1.bf16.msra.mxu0 0
        %1897 = vmatprep.subr.bf16.mxu0 0
        %1898 = vmatpush1.bf16.msra.mxu0 0
        %1899 = vmatprep.subr.bf16.mxu0 0
        %1900 = vmatpush1.bf16.msra.mxu0 0
        %1901 = vmatprep.subr.bf16.mxu0 0
        %1902 = vmatpush1.bf16.msra.mxu0 0
        %1903 = vmatprep.mubr.bf16.mxu0 0
        %1904 = vmatmul.mubr.bf16.gmra.mrb[0].mxu0 %v1865
        %v1905 = vpop.f32.mrb[0].mxu0
        %v1906 = vadd.f32 %v1833, %v1905
        %v1907 = vpop.f32.mrb[0].mxu0
        %v1908 = vadd.f32 %v1833, %v1907
        %v1909 = vpop.f32.mrb[0].mxu0
        %v1910 = vadd.f32 %v1838, %v1909
        %v1911 = vpop.f32.mrb[0].mxu0
        %v1912 = vadd.f32 %v1838, %v1911
        %1913 = vmatprep.mubr.bf16.mxu0 0
        %1914 = vmatmul.mubr.bf16.gmra.mrb[0].mxu0 %v1866
        %v1915 = vpop.f32.mrb[0].mxu0
        %v1916 = vadd.f32 %v1843, %v1915
        %v1917 = vpop.f32.mrb[0].mxu0
        %v1918 = vadd.f32 %v1843, %v1917
        %v1919 = vpop.f32.mrb[0].mxu0
        %v1920 = vadd.f32 %v1848, %v1919
        %v1921 = vpop.f32.mrb[0].mxu0
        %v1922 = vadd.f32 %v1848, %v1921
        %1923 = vmatprep.mubr.bf16.mxu0 0
        %1924 = vmatmul.mubr.bf16.gmra.mrb[0].mxu0 %v1867
        %v1925 = vpop.f32.mrb[0].mxu0
        %v1926 = vadd.f32 %v1853, %v1925
        %v1927 = vpop.f32.mrb[0].mxu0
        %v1928 = vadd.f32 %v1853, %v1927
        %v1929 = vpop.f32.mrb[0].mxu0
        %v1930 = vpop.f32.mrb[0].mxu0
        %1931 = vdwg.mxu0
        %1932 = vmatprep.subr.bf16.mxu0 %v1791
        %1933 = vmatpush1.bf16.msra.mxu0 %v1790
        %1934 = vmatprep.subr.bf16.mxu0 %v1795
        %1935 = vmatpush1.bf16.msra.mxu0 %v1794
        %1936 = vmatprep.subr.bf16.mxu0 %v1799
        %1937 = vmatpush1.bf16.msra.mxu0 %v1798
        %1938 = vmatprep.subr.bf16.mxu0 %v1803
        %1939 = vmatpush1.bf16.msra.mxu0 %v1802
        %1940 = vmatprep.subr.bf16.mxu0 %v1807
        %1941 = vmatpush1.bf16.msra.mxu0 %v1806
        %1942 = vmatprep.subr.bf16.mxu0 %v1811
        %1943 = vmatpush1.bf16.msra.mxu0 %v1810
        %1944 = vmatprep.subr.bf16.mxu0 %v1815
        %1945 = vmatpush1.bf16.msra.mxu0 %v1814
        %1946 = vmatprep.subr.bf16.mxu0 %v1819
        %1947 = vmatpush1.bf16.msra.mxu0 %v1818
        %1948 = vmatprep.subr.bf16.mxu0 0
        %1949 = vmatpush1.bf16.msra.mxu0 0
        %1950 = vmatprep.subr.bf16.mxu0 0
        %1951 = vmatpush1.bf16.msra.mxu0 0
        %1952 = vmatprep.subr.bf16.mxu0 0
        %1953 = vmatpush1.bf16.msra.mxu0 0
        %1954 = vmatprep.subr.bf16.mxu0 0
        %1955 = vmatpush1.bf16.msra.mxu0 0
        %1956 = vmatprep.subr.bf16.mxu0 0
        %1957 = vmatpush1.bf16.msra.mxu0 0
        %1958 = vmatprep.subr.bf16.mxu0 0
        %1959 = vmatpush1.bf16.msra.mxu0 0
        %1960 = vmatprep.subr.bf16.mxu0 0
        %1961 = vmatpush1.bf16.msra.mxu0 0
        %1962 = vmatprep.subr.bf16.mxu0 0
        %1963 = vmatpush1.bf16.msra.mxu0 0
        %1964 = vmatprep.mubr.bf16.mxu0 0
        %1965 = vmatmul.mubr.bf16.gmra.mrb[0].mxu0 %v1865
        %v1966 = vpop.f32.mrb[0].mxu0
        %v1967 = vadd.f32 %v1833, %v1966
        %v1968 = vpop.f32.mrb[0].mxu0
        %v1969 = vadd.f32 %v1833, %v1968
        %v1970 = vpop.f32.mrb[0].mxu0
        %v1971 = vadd.f32 %v1838, %v1970
        %v1972 = vpop.f32.mrb[0].mxu0
        %v1973 = vadd.f32 %v1838, %v1972
        %1974 = vmatprep.mubr.bf16.mxu0 0
        %1975 = vmatmul.mubr.bf16.gmra.mrb[0].mxu0 %v1866
        %v1976 = vpop.f32.mrb[0].mxu0
        %v1977 = vadd.f32 %v1843, %v1976
        %v1978 = vpop.f32.mrb[0].mxu0
        %v1979 = vadd.f32 %v1843, %v1978
        %v1980 = vpop.f32.mrb[0].mxu0
        %v1981 = vadd.f32 %v1848, %v1980
        %v1982 = vpop.f32.mrb[0].mxu0
        %v1983 = vadd.f32 %v1848, %v1982
        %1984 = vmatprep.mubr.bf16.mxu0 0
        %1985 = vmatmul.mubr.bf16.gmra.mrb[0].mxu0 %v1867
        %v1986 = vpop.f32.mrb[0].mxu0
        %v1987 = vadd.f32 %v1853, %v1986
        %v1988 = vpop.f32.mrb[0].mxu0
        %v1989 = vadd.f32 %v1853, %v1988
        %v1990 = vpop.f32.mrb[0].mxu0
        %v1991 = vpop.f32.mrb[0].mxu0
        %1992 = vdwg.mxu0
        %1993 = vst [vmem:[%s436] sm:$0xff] %v1906
        %1994 = vst [vmem:[%s436 + $0x8] sm:$0xff] %v1908
        %1995 = vst [vmem:[%s436 + $0x10] sm:$0xff] %v1967
        %1996 = vst [vmem:[%s436 + $0x18] sm:$0xff] %v1969
        %1997 = vst [vmem:[%s436 + $0x20] sm:$0xff] %v1910
        %1998 = vst [vmem:[%s436 + $0x28] sm:$0xff] %v1912
        %1999 = vst [vmem:[%s436 + $0x30] sm:$0xff] %v1971
        %2000 = vst [vmem:[%s436 + $0x38] sm:$0xff] %v1973
        %2001 = vst [vmem:[%s436 + $0x40] sm:$0xff] %v1916
        %2002 = vst [vmem:[%s436 + $0x48] sm:$0xff] %v1918
        %2003 = vst [vmem:[%s436 + $0x50] sm:$0xff] %v1977
        %2004 = vst [vmem:[%s436 + $0x58] sm:$0xff] %v1979
        %2005 = vst [vmem:[%s436 + $0x60] sm:$0xff] %v1920
        %2006 = vst [vmem:[%s436 + $0x68] sm:$0xff] %v1922
        %2007 = vst [vmem:[%s436 + $0x70] sm:$0xff] %v1981
        %2008 = vst [vmem:[%s436 + $0x78] sm:$0xff] %v1983
        %2009 = vst [vmem:[%s436 + $0x80] sm:$0xf] %v1926
        %2010 = vst [vmem:[%s436 + $0x88] sm:$0xf] %v1928
        %2011 = vst [vmem:[%s436 + $0x90] sm:$0xf] %v1987
        %2012 = vst [vmem:[%s436 + $0x98] sm:$0xf] %v1989
        %s2013 = sand.u32 %s194, 1
        %s2014 = sand.u32 %s194, 1
        %s2015 = smul.addr %s2014, 160
        %s2016 = scalar_lea.vmem [#allocation3], %s2015
        // Predicated region
        $region72: #{operation_net_forward.1} parent=66 // pred_check
          %p2017 = pneg %p204
        $region73: #{operation_net_forward.1} parent=66 // pred_check_branch
          %2019 = sbr.rel (%p2017) target = $region75
        $region74: #{operation_net_forward.1} parent=66 // pred_region
          %s2020 = smul.u32 4, %s23
          %s2021 = smul.addr %s22, 40
          %s2022 = sadd.s32 %s2020, %s2021
          %s2023 = smul.addr %s2022, 8
          %s2024 = scalar_lea.vmem %s7, %s2023
          // Predicated region
          $region76: #{operation_net_forward.1} parent=74 // pred_check
            _
          $region77: #{operation_net_forward.1} parent=74 // pred_check_branch
            %2026 = sbr.rel (0) target = $region79
          $region78: #{operation_net_forward.1} parent=74 // pred_region
            // Predicated region
            $region80: #{operation_net_forward.1} parent=78 // pred_check
              _
            $region81: #{operation_net_forward.1} parent=78 // pred_check_branch
              %2028 = sbr.rel (0) target = $region83
            $region82: #{operation_net_forward.1} parent=78 // pred_region
              loop: start=0, step=1, limit=1
              $region84: #{operation_net_forward.1} parent=82 // loop_pre_header
                _
              $region85: #{operation_net_forward.1} parent=82 // loop_header
                %s2030 = sphi 0, %s2034
                %p2031 = scmp.ge.s32.totalorder %s2030, 1
                %s2035 = sphi %s2016, %s2016
                %s2036 = sphi %s2024, %s2024
              $region86: #{operation_net_forward.1} parent=82 // loop_header_branch
                %2033 = sbr.rel (%p2031) target = $region90
              $region87: #{operation_net_forward.1} parent=82 // loop_body
                %v2037 = vld [vmem:[%s2035] sm:$0xff]
                %2038 = vst [vmem:[%s2036] sm:$0xff] %v2037
                %v2039 = vld [vmem:[%s2035 + $0x8] sm:$0xff]
                %2040 = vst [vmem:[%s2036 + $0x8] sm:$0xff] %v2039
                %v2041 = vld [vmem:[%s2035 + $0x10] sm:$0xff]
                %2042 = vst [vmem:[%s2036 + $0x10] sm:$0xff] %v2041
                %v2043 = vld [vmem:[%s2035 + $0x18] sm:$0xff]
                %2044 = vst [vmem:[%s2036 + $0x18] sm:$0xff] %v2043
                %v2045 = vld [vmem:[%s2035 + $0x20] sm:$0xff]
                %2046 = vst [vmem:[%s2036 + $0x40] sm:$0xff] %v2045
                %v2047 = vld [vmem:[%s2035 + $0x28] sm:$0xff]
                %2048 = vst [vmem:[%s2036 + $0x48] sm:$0xff] %v2047
                %v2049 = vld [vmem:[%s2035 + $0x30] sm:$0xff]
                %2050 = vst [vmem:[%s2036 + $0x50] sm:$0xff] %v2049
                %v2051 = vld [vmem:[%s2035 + $0x38] sm:$0xff]
                %2052 = vst [vmem:[%s2036 + $0x58] sm:$0xff] %v2051
                %v2053 = vld [vmem:[%s2035 + $0x40] sm:$0xff]
                %2054 = vst [vmem:[%s2036 + $0x80] sm:$0xff] %v2053
                %v2055 = vld [vmem:[%s2035 + $0x48] sm:$0xff]
                %2056 = vst [vmem:[%s2036 + $0x88] sm:$0xff] %v2055
                %v2057 = vld [vmem:[%s2035 + $0x50] sm:$0xff]
                %2058 = vst [vmem:[%s2036 + $0x90] sm:$0xff] %v2057
                %v2059 = vld [vmem:[%s2035 + $0x58] sm:$0xff]
                %2060 = vst [vmem:[%s2036 + $0x98] sm:$0xff] %v2059
                %v2061 = vld [vmem:[%s2035 + $0x60] sm:$0xff]
                %2062 = vst [vmem:[%s2036 + $0xc0] sm:$0xff] %v2061
                %v2063 = vld [vmem:[%s2035 + $0x68] sm:$0xff]
                %2064 = vst [vmem:[%s2036 + $0xc8] sm:$0xff] %v2063
                %v2065 = vld [vmem:[%s2035 + $0x70] sm:$0xff]
                %2066 = vst [vmem:[%s2036 + $0xd0] sm:$0xff] %v2065
                %v2067 = vld [vmem:[%s2035 + $0x78] sm:$0xff]
                %2068 = vst [vmem:[%s2036 + $0xd8] sm:$0xff] %v2067
                %v2069 = vld [vmem:[%s2035 + $0x80] sm:$0xff]
                %2070 = vst [vmem:[%s2036 + $0x100] sm:$0xff] %v2069
                %v2071 = vld [vmem:[%s2035 + $0x88] sm:$0xff]
                %2072 = vst [vmem:[%s2036 + $0x108] sm:$0xff] %v2071
                %v2073 = vld [vmem:[%s2035 + $0x90] sm:$0xff]
                %2074 = vst [vmem:[%s2036 + $0x110] sm:$0xff] %v2073
                %v2075 = vld [vmem:[%s2035 + $0x98] sm:$0xff]
                %2076 = vst [vmem:[%s2036 + $0x118] sm:$0xff] %v2075
              $region88: #{operation_net_forward.1} parent=82 // loop_footer
                %s2034 = sadd.s32 1, %s2030
              $region89: #{operation_net_forward.1} parent=82 // loop_footer_branch
                %2029 = sbr.rel target = $region85
              $region90: #{operation_net_forward.1} parent=82 // loop_exit
                _
            $region83: #{operation_net_forward.1} parent=78 // pred_fallthru
              _
            // Predicated region
            $region91: #{operation_net_forward.1} parent=78 // pred_check
              _
            $region92: #{operation_net_forward.1} parent=78 // pred_check_branch
              %2078 = sbr.rel target = $region94
            $region93: #{operation_net_forward.1} parent=78 // pred_region
              _
            $region94: #{operation_net_forward.1} parent=78 // pred_fallthru
              _
          $region79: #{operation_net_forward.1} parent=74 // pred_fallthru
            _
          %2079 = vnop
        $region75: #{operation_net_forward.1} parent=66 // pred_fallthru
          _
      $region67: #{operation_net_forward.1} parent=5 // pred_fallthru
        _
      %p2080 = scmp.le.s32.totalorder 2, %s13
      // Predicated region
      $region95: #{operation_net_forward.1} parent=5 // pred_check
        %p2081 = pneg %p2080
      $region96: #{operation_net_forward.1} parent=5 // pred_check_branch
        %2083 = sbr.rel (%p2081) target = $region98
      $region97: #{operation_net_forward.1} parent=5 // pred_region
        %s2084 = ssub.s32 %s13, 2
        // Predicated region
        $region99: #{operation_net_forward.1} parent=97 // pred_check
          %p2085 = pneg %p210
        $region100: #{operation_net_forward.1} parent=97 // pred_check_branch
          %2087 = sbr.rel (%p2085) target = $region102
        $region101: #{operation_net_forward.1} parent=97 // pred_region
          %s2088 = sand.u32 %s195, 1
          %s2089 = sand.u32 %s195, 1
          %s2090 = smul.addr %s2089, 160
          %s2091 = scalar_lea.vmem [#allocation3], %s2090
        $region102: #{operation_net_forward.1} parent=97 // pred_fallthru
          _
      $region98: #{operation_net_forward.1} parent=5 // pred_fallthru
        _
    $region6: #{operation_net_forward.1} parent=1 // loop_footer
      %s17 = sadd.s32 1, %s13
    $region7: #{operation_net_forward.1} parent=1 // loop_footer_branch
      %12 = sbr.rel target = $region3
    $region8: #{operation_net_forward.1} parent=1 // loop_exit
      _

</llo_original>
